<compile_context>
chip_gen: v5e
topology: v5e:2x2
jax: 0.10.0
libtpu: 0.0.40
codegen_flags: <defaults>
</compile_context>

<pallas_src>
import jax
import jax.numpy as jnp
from jax.experimental import pallas as pl
from jax.experimental.pallas import tpu as pltpu

MID_C = 512  # conv1 output channels (fixed by the module)


def _spatial_attention_kernel(x_ref, w1_ref, shift_ref, w2_ref, b2_ref,
                              out_ref, att_ref):
    # x_ref:     (C, tile_n)  bf16   channels on sublanes, spatial on lanes
    # w1_ref:    (512, C)     bf16   conv1 weight with BN scale folded in
    # shift_ref: (512, 1)     f32    conv1 bias + BN shift folded together
    # w2_ref:    (1, 512)     bf16   conv2 weight
    # b2_ref:    (1,) in SMEM f32    conv2 bias (scalar)
    # out_ref:   (512, tile_n) f32   att * normalized feature map
    # att_ref:   (1, tile_n)   f32   softplus attention score

    # conv1 (1x1) + inference BatchNorm (folded): bf16 MXU matmul, f32 accumulation.
    bn = jnp.dot(w1_ref[...], x_ref[...],
                 preferred_element_type=jnp.float32) + shift_ref[...]   # (512, tile_n) f32

    # F.normalize(p=2, dim=channel) with eps=1e-12:
    # clamp sum-of-squares at eps^2 and use rsqrt (EUP slot, keeps the VPU free).
    sumsq = jnp.sum(bn * bn, axis=0, keepdims=True)                     # (1, tile_n)
    inv_norm = jax.lax.rsqrt(jnp.maximum(sumsq, 1e-24))                 # == 1/max(||bn||,1e-12)

    # ReLU then conv2 (1x1, 512 -> 1) on the (otherwise idle) MXU: (1,512)x(512,tile_n).
    relu_bf = jnp.maximum(bn, 0.0).astype(jnp.bfloat16)
    att = jnp.dot(w2_ref[...], relu_bf,
                  preferred_element_type=jnp.float32) + b2_ref[0]       # (1, tile_n)

    # Softplus(beta=1, threshold=20)
    att_score = jnp.where(att > 20.0, att,
                          jnp.log1p(jnp.exp(jnp.minimum(att, 20.0))))

    # Fused per-lane scale: out = bn * (att_score * inv_norm) -- single 512 x tile_n multiply.
    scale = att_score * inv_norm                                        # (1, tile_n)
    out_ref[...] = (bn * scale).astype(out_ref.dtype)
    att_ref[...] = att_score


def spatial_attention_2d(x_nchw, params, *, max_tile_n=512):
    """x_nchw: (B, C, H, W) float32. Returns (out (B,512,H,W), att (B,1,H,W))."""
    B, C, H, W = x_nchw.shape
    HW = H * W

    # Channels stay on the sublane axis, spatial on the lane axis: pure reshape, no transpose.
    # Cast to bf16 in the wrapper so the DMA itself moves bf16 (halves the input HBM read).
    x_rows = x_nchw.reshape(B, C, HW).astype(jnp.bfloat16)

    # Spatial tile: lane-dense (multiple of 128), capped at max_tile_n.
    tile_n = min(max_tile_n, pl.cdiv(HW, 128) * 128)
    # Guarantee >= 2 grid steps so both v7x TensorCores get work (free on v5e/v6e).
    if B * pl.cdiv(HW, tile_n) < 2 and tile_n > 128:
        tile_n = max(128, pl.cdiv(pl.cdiv(HW, 2), 128) * 128)
    hw_pad = pl.cdiv(HW, tile_n) * tile_n
    if hw_pad != HW:
        x_rows = jnp.pad(x_rows, ((0, 0), (0, 0), (0, hw_pad - HW)))

    # Fold conv1 bias + inference-mode BN running stats into one weight / shift (in f32),
    # then cast the matmul weight to bf16 for the MXU.
    eps = 1e-5
    bn_scale = params["gamma"] / jnp.sqrt(params["run_var"] + eps)              # (512,)
    w1_t = (params["w1"] * bn_scale[None, :]).T.astype(jnp.bfloat16)            # (512, C) bf16
    shift = (params["b1"] * bn_scale + params["beta"]
             - params["run_mean"] * bn_scale).reshape(MID_C, 1)                 # (512, 1) f32
    w2_t = params["w2"].reshape(1, MID_C).astype(jnp.bfloat16)                  # (1, 512) bf16
    b2 = params["b2"].reshape(1).astype(jnp.float32)                            # (1,) -> SMEM

    grid = (B, hw_pad // tile_n)
    full = lambda b, s: (0, 0)

    out_rows, att_rows = pl.pallas_call(
        _spatial_attention_kernel,
        out_shape=(
            jax.ShapeDtypeStruct((B, MID_C, hw_pad), jnp.float32),
            jax.ShapeDtypeStruct((B, 1, hw_pad), jnp.float32),
        ),
        grid_spec=pltpu.PrefetchScalarGridSpec(
            num_scalar_prefetch=0,
            grid=grid,
            in_specs=[
                pl.BlockSpec((None, C, tile_n), lambda b, s: (b, 0, s)),
                pl.BlockSpec((MID_C, C), full),
                pl.BlockSpec((MID_C, 1), full),
                pl.BlockSpec((1, MID_C), full),
                pl.BlockSpec(memory_space=pltpu.MemorySpace.SMEM),   # b2 scalar
            ],
            out_specs=[
                pl.BlockSpec((None, MID_C, tile_n), lambda b, s: (b, 0, s)),
                pl.BlockSpec((None, 1, tile_n), lambda b, s: (b, 0, s)),
            ],
        ),
        compiler_params=pltpu.CompilerParams(
            dimension_semantics=("parallel", "parallel"),
            vmem_limit_bytes=40 * 1024 * 1024),
    )(x_rows, w1_t, shift, w2_t, b2)

    if hw_pad != HW:
        out_rows = out_rows[:, :, :HW]
        att_rows = att_rows[:, :, :HW]

    # Free reshapes: outputs are already in NCHW channel-major order.
    out = out_rows.reshape(B, MID_C, H, W)
    att = att_rows.reshape(B, 1, H, W)
    return out, att


def init_params(key, in_c):
    """Deterministic synthetic parameters (shapes match the PyTorch module)."""
    k1, k2, k3, k4, k5, k6, k7 = jax.random.split(key, 7)
    # conv1: weight (512, in_c, 1, 1) -> stored as (in_c, 512) for matmul convention
    w1 = jax.random.normal(k1, (in_c, MID_C), jnp.float32) * (1.0 / jnp.sqrt(in_c))
    b1 = jax.random.normal(k2, (MID_C,), jnp.float32) * 0.01
    gamma = 1.0 + 0.1 * jax.random.normal(k3, (MID_C,), jnp.float32)
    beta = 0.1 * jax.random.normal(k4, (MID_C,), jnp.float32)
    run_mean = 0.1 * jax.random.normal(k5, (MID_C,), jnp.float32)
    run_var = jnp.abs(1.0 + 0.1 * jax.random.normal(k6, (MID_C,), jnp.float32))
    # conv2: weight (1, 512, 1, 1) -> stored as (512, 1)
    w2 = jax.random.normal(k7, (MID_C, 1), jnp.float32) * (1.0 / jnp.sqrt(MID_C))
    b2 = jnp.zeros((1,), jnp.float32)
    return dict(w1=w1, b1=b1, gamma=gamma, beta=beta,
                run_mean=run_mean, run_var=run_var, w2=w2, b2=b2)


def _reference(x_nchw, params):
    """Pure-JAX f32 reference (inference-mode BN), mirrors the PyTorch forward."""
    eps = 1e-5
    x = jnp.einsum("bchw,co->bohw", x_nchw, params["w1"]) \
        + params["b1"][None, :, None, None]
    scale = params["gamma"] / jnp.sqrt(params["run_var"] + eps)
    shift = params["beta"] - params["run_mean"] * scale
    x = x * scale[None, :, None, None] + shift[None, :, None, None]
    norm = jnp.sqrt(jnp.sum(x * x, axis=1, keepdims=True))
    fmap = x / jnp.maximum(norm, 1e-12)
    r = jnp.maximum(x, 0.0)
    att = jnp.einsum("bchw,co->bohw", r, params["w2"]) \
        + params["b2"][None, :, None, None]
    att_score = jnp.where(att > 20.0, att,
                          jnp.log1p(jnp.exp(jnp.minimum(att, 20.0))))
    return att_score * fmap, att_score


if __name__ == "__main__":
    key = jax.random.PRNGKey(0)
    kx, kp = jax.random.split(key)

    B, C, H, W = 2, 4, 16, 16
    x = jax.random.normal(kx, (B, C, H, W), jnp.float32)
    params = init_params(kp, C)

    out, att_score = spatial_attention_2d(x, params)
    jax.block_until_ready((out, att_score))

    assert out.shape == (B, MID_C, H, W)
    assert att_score.shape == (B, 1, H, W)

    # smoke check against a pure-JAX f32 reference (bf16 matmul inputs -> loose tolerance)
    ref_out, ref_att = _reference(x, params)
    assert jnp.allclose(out, ref_out, atol=2e-2, rtol=2e-2)
    assert jnp.allclose(att_score, ref_att, atol=2e-2, rtol=2e-2)

    print("KERNEL_OK")
</pallas_src>

<mosaic_0001>
module attributes {stable_mosaic.version = 11 : i64} {
  func.func @_spatial_attention_kernel(%arg0: i32, %arg1: i32, %arg2: memref<1x4x256xbf16, #tpu.memory_space<vmem>>, %arg3: memref<512x4xbf16, #tpu.memory_space<vmem>>, %arg4: memref<512x1xf32, #tpu.memory_space<vmem>>, %arg5: memref<1x512xbf16, #tpu.memory_space<vmem>>, %arg6: memref<1xf32, #tpu.memory_space<smem>>, %arg7: memref<1x512x256xf32, #tpu.memory_space<vmem>>, %arg8: memref<1x1x256xf32, #tpu.memory_space<vmem>>) attributes {dimension_semantics = [#tpu.dimension_semantics<parallel>, #tpu.dimension_semantics<parallel>], iteration_bounds = array<i64: 2, 1>, scalar_prefetch = 0 : i64, scratch_operands = 0 : i64, tpu.core_type = #tpu.core_type<tc>, window_params = [{transform_indices = @transform_0, window_bounds = array<i64: 1, 4, 256>}, {pipeline_mode = #tpu.pipeline_mode<synchronous>, transform_indices = @transform_1, window_bounds = array<i64: 512, 4>}, {pipeline_mode = #tpu.pipeline_mode<synchronous>, transform_indices = @transform_2, window_bounds = array<i64: 512, 1>}, {pipeline_mode = #tpu.pipeline_mode<synchronous>, transform_indices = @transform_3, window_bounds = array<i64: 1, 512>}, {transform_indices = @transform_4, window_bounds = array<i64: 1>}, {transform_indices = @transform_5, window_bounds = array<i64: 1, 512, 256>}, {transform_indices = @transform_6, window_bounds = array<i64: 1, 1, 256>}]} {
    %c0 = arith.constant 0 : index
    %c0_0 = arith.constant 0 : index
    %0 = vector.load %arg3[%c0, %c0_0] : memref<512x4xbf16, #tpu.memory_space<vmem>>, vector<512x4xbf16>
    %c0_1 = arith.constant 0 : index
    %c0_2 = arith.constant 0 : index
    %c0_3 = arith.constant 0 : index
    %1 = vector.load %arg2[%c0_1, %c0_2, %c0_3] : memref<1x4x256xbf16, #tpu.memory_space<vmem>>, vector<1x4x256xbf16>
    %2 = vector.shape_cast %1 : vector<1x4x256xbf16> to vector<4x256xbf16>
    %cst = arith.constant dense<0.000000e+00> : vector<512x256xf32>
    %3 = tpu.matmul %0, %2, %cst {dimension_numbers = #tpu.dot_dimension_numbers<[1], [0], [0], [1], [0, 0, 1, 1], [], []>} : vector<512x4xbf16>, vector<4x256xbf16>, vector<512x256xf32> -> vector<512x256xf32>
    %c0_4 = arith.constant 0 : index
    %c0_5 = arith.constant 0 : index
    %4 = vector.load %arg4[%c0_4, %c0_5] : memref<512x1xf32, #tpu.memory_space<vmem>>, vector<512x1xf32>
    %5 = vector.broadcast %4 : vector<512x1xf32> to vector<512x256xf32>
    %6 = arith.addf %3, %5 : vector<512x256xf32>
    %7 = arith.mulf %6, %6 : vector<512x256xf32>
    %cst_6 = arith.constant dense<0.000000e+00> : vector<256xf32>
    %8 = vector.multi_reduction <add>, %7, %cst_6 [0] : vector<512x256xf32> to vector<256xf32>
    %9 = vector.shape_cast %8 : vector<256xf32> to vector<1x256xf32>
    %cst_7 = arith.constant 1.000000e-24 : f32
    %10 = vector.broadcast %cst_7 : f32 to vector<1x256xf32>
    %11 = arith.maximumf %9, %10 : vector<1x256xf32>
    %12 = math.rsqrt %11 : vector<1x256xf32>
    %cst_8 = arith.constant 0.000000e+00 : f32
    %13 = vector.broadcast %cst_8 : f32 to vector<512x256xf32>
    %14 = arith.maximumf %6, %13 : vector<512x256xf32>
    %15 = arith.truncf %14 : vector<512x256xf32> to vector<512x256xbf16>
    %c0_9 = arith.constant 0 : index
    %c0_10 = arith.constant 0 : index
    %16 = vector.load %arg5[%c0_9, %c0_10] : memref<1x512xbf16, #tpu.memory_space<vmem>>, vector<1x512xbf16>
    %cst_11 = arith.constant dense<0.000000e+00> : vector<1x256xf32>
    %17 = tpu.matmul %16, %15, %cst_11 {dimension_numbers = #tpu.dot_dimension_numbers<[1], [0], [0], [1], [0, 0, 1, 1], [], []>} : vector<1x512xbf16>, vector<512x256xbf16>, vector<1x256xf32> -> vector<1x256xf32>
    %c0_12 = arith.constant 0 : index
    %18 = memref.load %arg6[%c0_12] : memref<1xf32, #tpu.memory_space<smem>>
    %19 = vector.broadcast %18 : f32 to vector<1x256xf32>
    %20 = arith.addf %17, %19 : vector<1x256xf32>
    %cst_13 = arith.constant 2.000000e+01 : f32
    %21 = vector.broadcast %cst_13 : f32 to vector<1x256xf32>
    %22 = arith.cmpf ogt, %20, %21 : vector<1x256xf32>
    %cst_14 = arith.constant 2.000000e+01 : f32
    %23 = vector.broadcast %cst_14 : f32 to vector<1x256xf32>
    %24 = arith.minimumf %20, %23 : vector<1x256xf32>
    %25 = math.exp %24 : vector<1x256xf32>
    %26 = math.log1p %25 : vector<1x256xf32>
    %27 = arith.select %22, %20, %26 : vector<1x256xi1>, vector<1x256xf32>
    %28 = arith.mulf %27, %12 : vector<1x256xf32>
    %29 = vector.broadcast %28 : vector<1x256xf32> to vector<512x256xf32>
    %30 = arith.mulf %6, %29 : vector<512x256xf32>
    %c0_15 = arith.constant 0 : index
    %c0_16 = arith.constant 0 : index
    %c0_17 = arith.constant 0 : index
    %31 = vector.load %arg7[%c0_15, %c0_16, %c0_17] : memref<1x512x256xf32, #tpu.memory_space<vmem>>, vector<1x512x256xf32>
    %32 = vector.shape_cast %31 : vector<1x512x256xf32> to vector<512x256xf32>
    %33 = vector.shape_cast %30 : vector<512x256xf32> to vector<1x512x256xf32>
    tpu.vector_store %arg7[%c0_15, %c0_16, %c0_17], %33 {strides = array<i32>} : memref<1x512x256xf32, #tpu.memory_space<vmem>>, vector<1x512x256xf32>,
    %c0_18 = arith.constant 0 : index
    %c0_19 = arith.constant 0 : index
    %c0_20 = arith.constant 0 : index
    %34 = vector.load %arg8[%c0_18, %c0_19, %c0_20] : memref<1x1x256xf32, #tpu.memory_space<vmem>>, vector<1x1x256xf32>
    %35 = vector.shape_cast %34 : vector<1x1x256xf32> to vector<1x256xf32>
    %36 = vector.shape_cast %27 : vector<1x256xf32> to vector<1x1x256xf32>
    tpu.vector_store %arg8[%c0_18, %c0_19, %c0_20], %36 {strides = array<i32>} : memref<1x1x256xf32, #tpu.memory_space<vmem>>, vector<1x1x256xf32>,
    return
  }
  func.func @transform_0(%arg0: i32, %arg1: i32) -> (i32, i32, i32) {
    %c0_i32 = arith.constant 0 : i32
    %c0_i32_0 = arith.constant 0 : i32
    return %arg0, %c0_i32, %arg1 : i32, i32, i32
  }
  func.func @transform_1(%arg0: i32, %arg1: i32) -> (i32, i32) {
    %c0_i32 = arith.constant 0 : i32
    %c0_i32_0 = arith.constant 0 : i32
    %c0_i32_1 = arith.constant 0 : i32
    return %c0_i32, %c0_i32_0 : i32, i32
  }
  func.func @transform_2(%arg0: i32, %arg1: i32) -> (i32, i32) {
    %c0_i32 = arith.constant 0 : i32
    %c0_i32_0 = arith.constant 0 : i32
    %c0_i32_1 = arith.constant 0 : i32
    return %c0_i32, %c0_i32_0 : i32, i32
  }
  func.func @transform_3(%arg0: i32, %arg1: i32) -> (i32, i32) {
    %c0_i32 = arith.constant 0 : i32
    %c0_i32_0 = arith.constant 0 : i32
    %c0_i32_1 = arith.constant 0 : i32
    return %c0_i32, %c0_i32_0 : i32, i32
  }
  func.func @transform_4(%arg0: i32, %arg1: i32) -> i32 {
    %c0_i32 = arith.constant 0 : i32
    %c0_i32_0 = arith.constant 0 : i32
    return %c0_i32 : i32
  }
  func.func @transform_5(%arg0: i32, %arg1: i32) -> (i32, i32, i32) {
    %c0_i32 = arith.constant 0 : i32
    %c0_i32_0 = arith.constant 0 : i32
    return %arg0, %c0_i32, %arg1 : i32, i32, i32
  }
  func.func @transform_6(%arg0: i32, %arg1: i32) -> (i32, i32, i32) {
    %c0_i32 = arith.constant 0 : i32
    %c0_i32_0 = arith.constant 0 : i32
    return %arg0, %c0_i32, %arg1 : i32, i32, i32
  }
}

</mosaic_0001>

<llo_original>
// kernel: tpu_custom_call.1
$region0: #{tpu_custom_call.1}
  #allocation0 [shape = 'u32[]', space=smem, size = 0x4, offset = 0x4, fixed_abs, tag = 'smem constant byte address 0x4 - core index']
  #allocation1 [shape = 'u32[72,128]{1,0:T(1,128)}', space=vmem, size = 0x9000, scoped, tag = 'internal scratch']
  #allocation2 [shape = 'f32[1]{0:T(128)S(6)}', space=smem, size = 0x200, scoped, tag = 'scoped memory for tpu_custom_call.1']
  %s0 = inlined_call_operand.vmem [shape: bf16[2,4,256], index: 0, kind: input, shape index: {}]
  %s1 = inlined_call_operand.vmem [shape: bf16[512,4], index: 1, kind: input, shape index: {}]
  %s2 = inlined_call_operand.vmem [shape: f32[512,1], index: 2, kind: input, shape index: {}]
  %s3 = inlined_call_operand.vmem [shape: bf16[1,512], index: 3, kind: input, shape index: {}]
  %s4 = inlined_call_operand.<no memory space> [shape: f32[1], index: 4, kind: input, shape index: {}]
  %s5 = inlined_call_operand.hbm [shape: f32[2,512,256], index: 5, kind: output, shape index: {0}]
  %s6 = inlined_call_operand.hbm [shape: f32[2,1,256], index: 6, kind: output, shape index: {1}]
  %7 = xla_tuple %s5, %s6
  %s8 = sld [smem:[#allocation0]]
  $region61: #{tpu_custom_call.1} parent=0
    _
  %s10 = ssub.s32 1, %s8
  %s11 = scalar_select 0, %s10, %s8
  %12 = sst [smem:[#allocation2]] %s4
  $region1: #{tpu_custom_call.1} parent=0
    #allocation3 [shape = 'u8[1048576]{0}', space=vmem, size = 0x100000, scoped, tag = 'output window, operand 0']
    #allocation4 [shape = 's32[2]{0}', space=sflag, size = 0x8, scoped, tag = 'scoped memory for tpu_custom_call.1']
    #allocation5 [shape = 'u8[2048]{0}', space=vmem, size = 0x800, scoped, tag = 'output window, operand 1']
    #allocation6 [shape = 's32[2]{0}', space=sflag, size = 0x8, scoped, tag = 'scoped memory for tpu_custom_call.1']
    %13 = vsyncpa [#allocation4], 0
    %s14 = scalar_lea.sflag [#allocation4], 1
    %15 = vsyncpa %s14, 0
    %16 = vsyncpa [#allocation6], 0
    %s17 = scalar_lea.sflag [#allocation6], 1
    %18 = vsyncpa %s17, 0
    loop: start=0, step=1, limit=4
    $region2: #{tpu_custom_call.1} parent=1 // loop_pre_header
      _
    $region3: #{tpu_custom_call.1} parent=1 // loop_header
      %s20 = sphi 0, %s24
      %p21 = scmp.ge.s32.totalorder %s20, 4
      %s27 = sphi 0, %s39
      %s28 = sphi 0, %s35
      %s29 = sphi 0, %s27
      %s30 = sphi 0, %s28
      %s31 = sphi 0, %s29
      %s32 = sphi 0, %s30
      %s44 = sphi 0, %s46
      %s47 = sphi 0, %s44
      %s48 = sphi 0, %s47
      %s64 = sphi 0, %s48
      %s68 = sphi 0, %s68
      %s70 = sphi 0, %s68
      %s71 = sphi 0, %s70
      %s85 = sphi 0, %s71
      %s89 = sphi 0, %s89
      %s91 = sphi 0, %s89
      %s92 = sphi 0, %s91
      %s106 = sphi 0, %s92
      %s110 = sphi 0, %s110
      %s112 = sphi 0, %s110
      %s113 = sphi 0, %s112
      %s127 = sphi 0, %s113
      %s131 = sphi 0, %s131
      %s133 = sphi 0, %s131
      %s134 = sphi 0, %s133
      %s148 = sphi 0, %s134
      %s156 = sphi 0, %s158
      %s159 = sphi 0, %s156
      %s160 = sphi 0, %s159
      %s176 = sphi 0, %s160
      %s184 = sphi 0, %s186
      %s187 = sphi 0, %s184
      %s188 = sphi 0, %s187
      %s204 = sphi 0, %s188
    $region4: #{tpu_custom_call.1} parent=1 // loop_header_branch
      %23 = sbr.rel (%p21) target = $region8
    $region5: #{tpu_custom_call.1} parent=1 // loop_body
      %s25 = ssub.s32 %s20, 1
      %s26 = ssub.s32 %s20, 2
      %s33 = sadd.s32 1, %s28
      %p34 = scmp.ge.s32.totalorder %s33, 1
      %s35 = scalar_select %p34, 0, %s33
      %s36 = sadd.s32 1, %s27
      %s37 = scalar_select %p34, %s36, %s27
      %p38 = scmp.ge.s32.totalorder %s37, 2
      %s39 = scalar_select %p38, 0, %s37
      %s40 = ssub.s32 %s27, %s39
      %s41 = ssub.s32 %s28, %s35
      %s42 = sor.u32 %s40, %s41
      %p43 = scmp.eq.s32.totalorder %s42, 0
      %s45 = sadd.s32 %s44, 1
      %s46 = scalar_select %p43, %s44, %s45
      %p49 = pneg %p43
      %p50 = scmp.eq.s32.totalorder %s20, 1
      %p51 = por %p49, %p50
      %p52 = scmp.ne.s32.totalorder %s44, %s47
      %p53 = scmp.eq.s32.totalorder %s20, 0
      %p54 = por %p52, %p53
      %p55 = scmp.ne.s32.totalorder %s44, %s47
      %p56 = scmp.eq.s32.totalorder %s25, 1
      %p57 = por %p55, %p56
      %p58 = scmp.ne.s32.totalorder %s47, %s48
      %p59 = scmp.eq.s32.totalorder %s25, 0
      %p60 = por %p58, %p59
      %p61 = scmp.ne.s32.totalorder %s47, %s48
      %p62 = scmp.eq.s32.totalorder %s26, 1
      %p63 = por %p61, %p62
      %p65 = scmp.ne.s32.totalorder %s48, %s64
      %p66 = scmp.eq.s32.totalorder %s26, 0
      %p67 = por %p65, %p66
      %s69 = sadd.s32 %s68, 1
      %p72 = scmp.eq.s32.totalorder %s20, 1
      %p73 = scmp.ne.s32.totalorder %s68, %s70
      %p74 = scmp.eq.s32.totalorder %s20, 0
      %p75 = por %p73, %p74
      %p76 = scmp.ne.s32.totalorder %s68, %s70
      %p77 = scmp.eq.s32.totalorder %s25, 1
      %p78 = por %p76, %p77
      %p79 = scmp.ne.s32.totalorder %s70, %s71
      %p80 = scmp.eq.s32.totalorder %s25, 0
      %p81 = por %p79, %p80
      %p82 = scmp.ne.s32.totalorder %s70, %s71
      %p83 = scmp.eq.s32.totalorder %s26, 1
      %p84 = por %p82, %p83
      %p86 = scmp.ne.s32.totalorder %s71, %s85
      %p87 = scmp.eq.s32.totalorder %s26, 0
      %p88 = por %p86, %p87
      %s90 = sadd.s32 %s89, 1
      %p93 = scmp.eq.s32.totalorder %s20, 1
      %p94 = scmp.ne.s32.totalorder %s89, %s91
      %p95 = scmp.eq.s32.totalorder %s20, 0
      %p96 = por %p94, %p95
      %p97 = scmp.ne.s32.totalorder %s89, %s91
      %p98 = scmp.eq.s32.totalorder %s25, 1
      %p99 = por %p97, %p98
      %p100 = scmp.ne.s32.totalorder %s91, %s92
      %p101 = scmp.eq.s32.totalorder %s25, 0
      %p102 = por %p100, %p101
      %p103 = scmp.ne.s32.totalorder %s91, %s92
      %p104 = scmp.eq.s32.totalorder %s26, 1
      %p105 = por %p103, %p104
      %p107 = scmp.ne.s32.totalorder %s92, %s106
      %p108 = scmp.eq.s32.totalorder %s26, 0
      %p109 = por %p107, %p108
      %s111 = sadd.s32 %s110, 1
      %p114 = scmp.eq.s32.totalorder %s20, 1
      %p115 = scmp.ne.s32.totalorder %s110, %s112
      %p116 = scmp.eq.s32.totalorder %s20, 0
      %p117 = por %p115, %p116
      %p118 = scmp.ne.s32.totalorder %s110, %s112
      %p119 = scmp.eq.s32.totalorder %s25, 1
      %p120 = por %p118, %p119
      %p121 = scmp.ne.s32.totalorder %s112, %s113
      %p122 = scmp.eq.s32.totalorder %s25, 0
      %p123 = por %p121, %p122
      %p124 = scmp.ne.s32.totalorder %s112, %s113
      %p125 = scmp.eq.s32.totalorder %s26, 1
      %p126 = por %p124, %p125
      %p128 = scmp.ne.s32.totalorder %s113, %s127
      %p129 = scmp.eq.s32.totalorder %s26, 0
      %p130 = por %p128, %p129
      %s132 = sadd.s32 %s131, 1
      %p135 = scmp.eq.s32.totalorder %s20, 1
      %p136 = scmp.ne.s32.totalorder %s131, %s133
      %p137 = scmp.eq.s32.totalorder %s20, 0
      %p138 = por %p136, %p137
      %p139 = scmp.ne.s32.totalorder %s131, %s133
      %p140 = scmp.eq.s32.totalorder %s25, 1
      %p141 = por %p139, %p140
      %p142 = scmp.ne.s32.totalorder %s133, %s134
      %p143 = scmp.eq.s32.totalorder %s25, 0
      %p144 = por %p142, %p143
      %p145 = scmp.ne.s32.totalorder %s133, %s134
      %p146 = scmp.eq.s32.totalorder %s26, 1
      %p147 = por %p145, %p146
      %p149 = scmp.ne.s32.totalorder %s134, %s148
      %p150 = scmp.eq.s32.totalorder %s26, 0
      %p151 = por %p149, %p150
      %s152 = ssub.s32 %s27, %s39
      %s153 = ssub.s32 %s28, %s35
      %s154 = sor.u32 %s152, %s153
      %p155 = scmp.eq.s32.totalorder %s154, 0
      %s157 = sadd.s32 %s156, 1
      %s158 = scalar_select %p155, %s156, %s157
      %p161 = pneg %p155
      %p162 = scmp.eq.s32.totalorder %s20, 1
      %p163 = por %p161, %p162
      %p164 = scmp.ne.s32.totalorder %s156, %s159
      %p165 = scmp.eq.s32.totalorder %s20, 0
      %p166 = por %p164, %p165
      %p167 = scmp.ne.s32.totalorder %s156, %s159
      %p168 = scmp.eq.s32.totalorder %s25, 1
      %p169 = por %p167, %p168
      %p170 = scmp.ne.s32.totalorder %s159, %s160
      %p171 = scmp.eq.s32.totalorder %s25, 0
      %p172 = por %p170, %p171
      %p173 = scmp.ne.s32.totalorder %s159, %s160
      %p174 = scmp.eq.s32.totalorder %s26, 1
      %p175 = por %p173, %p174
      %p177 = scmp.ne.s32.totalorder %s160, %s176
      %p178 = scmp.eq.s32.totalorder %s26, 0
      %p179 = por %p177, %p178
      %s180 = ssub.s32 %s27, %s39
      %s181 = ssub.s32 %s28, %s35
      %s182 = sor.u32 %s180, %s181
      %p183 = scmp.eq.s32.totalorder %s182, 0
      %s185 = sadd.s32 %s184, 1
      %s186 = scalar_select %p183, %s184, %s185
      %p189 = pneg %p183
      %p190 = scmp.eq.s32.totalorder %s20, 1
      %p191 = por %p189, %p190
      %p192 = scmp.ne.s32.totalorder %s184, %s187
      %p193 = scmp.eq.s32.totalorder %s20, 0
      %p194 = por %p192, %p193
      %p195 = scmp.ne.s32.totalorder %s184, %s187
      %p196 = scmp.eq.s32.totalorder %s25, 1
      %p197 = por %p195, %p196
      %p198 = scmp.ne.s32.totalorder %s187, %s188
      %p199 = scmp.eq.s32.totalorder %s25, 0
      %p200 = por %p198, %p199
      %p201 = scmp.ne.s32.totalorder %s187, %s188
      %p202 = scmp.eq.s32.totalorder %s26, 1
      %p203 = por %p201, %p202
      %p205 = scmp.ne.s32.totalorder %s188, %s204
      %p206 = scmp.eq.s32.totalorder %s26, 0
      %p207 = por %p205, %p206
      %p208 = scmp.le.s32.totalorder 1, %s20
      %p209 = scmp.lt.s32.totalorder %s20, 3
      %p210 = pnand %p208, %p209
      %p211 = pneg %p210
      // Predicated region
      $region9: #{tpu_custom_call.1} parent=5 // pred_check
        _
      $region10: #{tpu_custom_call.1} parent=5 // pred_check_branch
        %213 = sbr.rel (%p210) target = $region12
      $region11: #{tpu_custom_call.1} parent=5 // pred_region
        %s214 = ssub.s32 %s20, 1
        // Predicated region
        $region13: #{tpu_custom_call.1} parent=11 // pred_check
          %p215 = pneg %p81
        $region14: #{tpu_custom_call.1} parent=11 // pred_check_branch
          %217 = sbr.rel (%p215) target = $region16
        $region15: #{tpu_custom_call.1} parent=11 // pred_region
          _
        $region16: #{tpu_custom_call.1} parent=11 // pred_fallthru
          _
        // Predicated region
        $region17: #{tpu_custom_call.1} parent=11 // pred_check
          %p218 = pneg %p102
        $region18: #{tpu_custom_call.1} parent=11 // pred_check_branch
          %220 = sbr.rel (%p218) target = $region20
        $region19: #{tpu_custom_call.1} parent=11 // pred_region
          _
        $region20: #{tpu_custom_call.1} parent=11 // pred_fallthru
          _
        // Predicated region
        $region21: #{tpu_custom_call.1} parent=11 // pred_check
          %p221 = pneg %p123
        $region22: #{tpu_custom_call.1} parent=11 // pred_check_branch
          %223 = sbr.rel (%p221) target = $region24
        $region23: #{tpu_custom_call.1} parent=11 // pred_region
          _
        $region24: #{tpu_custom_call.1} parent=11 // pred_fallthru
          _
        // Predicated region
        $region25: #{tpu_custom_call.1} parent=11 // pred_check
          %p224 = pneg %p144
        $region26: #{tpu_custom_call.1} parent=11 // pred_check_branch
          %226 = sbr.rel (%p224) target = $region28
        $region27: #{tpu_custom_call.1} parent=11 // pred_region
          _
        $region28: #{tpu_custom_call.1} parent=11 // pred_fallthru
          _
      $region12: #{tpu_custom_call.1} parent=5 // pred_fallthru
        _
      %p227 = scmp.lt.s32.totalorder %s20, 2
      // Predicated region
      $region29: #{tpu_custom_call.1} parent=5 // pred_check
        %p228 = pneg %p227
      $region30: #{tpu_custom_call.1} parent=5 // pred_check_branch
        %230 = sbr.rel (%p228) target = $region32
      $region31: #{tpu_custom_call.1} parent=5 // pred_region
        // Predicated region
        $region33: #{tpu_custom_call.1} parent=31 // pred_check
          %p231 = pneg %p54
        $region34: #{tpu_custom_call.1} parent=31 // pred_check_branch
          %233 = sbr.rel (%p231) target = $region36
        $region35: #{tpu_custom_call.1} parent=31 // pred_region
          %s234 = smul.u32 2, %s28
          %p235 = scmp.lt.s32.totalorder %s27, 1
          %s236 = scalar_select %p235, %s27, 1
          %p237 = scmp.lt.s32.totalorder %s234, 1
          %s238 = scalar_select %p237, %s234, 1
          %s239 = smul.addr %s236, 2
          %s240 = sadd.s32 %s238, %s239
          %s241 = smul.addr %s240, 2
          %s242 = scalar_lea.vmem %s0, %s241
          %s243 = smul.u32 2, %s28
        $region36: #{tpu_custom_call.1} parent=31 // pred_fallthru
          _
      $region32: #{tpu_custom_call.1} parent=5 // pred_fallthru
        _
      %p244 = scmp.le.s32.totalorder 1, %s20
      %p245 = scmp.lt.s32.totalorder %s20, 3
      %p246 = pnand %p244, %p245
      %p247 = pneg %p246
      // Predicated region
      $region37: #{tpu_custom_call.1} parent=5 // pred_check
        _
      $region38: #{tpu_custom_call.1} parent=5 // pred_check_branch
        %249 = sbr.rel (%p246) target = $region40
      $region39: #{tpu_custom_call.1} parent=5 // pred_region
        %s250 = ssub.s32 %s20, 1
        %s251 = smul.u32 2, %s30
        %p252 = scmp.lt.s32.totalorder %s29, 1
        %s253 = scalar_select %p252, %s29, 1
        %p254 = scmp.lt.s32.totalorder %s251, 1
        %s255 = scalar_select %p254, %s251, 1
        %s256 = smul.addr %s253, 2
        %s257 = sadd.s32 %s255, %s256
        %s258 = smul.addr %s257, 2
        %s259 = scalar_lea.vmem %s0, %s258
        %p260 = pneg %p60
        %p261 = pneg %p57
        %p262 = pneg %p81
        %p263 = pneg %p78
        %p264 = pneg %p102
        %p265 = pneg %p99
        %p266 = pneg %p123
        %p267 = pneg %p120
        %p268 = pneg %p144
        %p269 = pneg %p141
        %p270 = pneg %p172
        %p271 = pneg %p169
        %s272 = sand.u32 %s159, 1
        %s273 = scalar_lea.sflag [#allocation4], %s272
        %s274 = sand.u32 %s159, 1
        %s275 = smul.addr %s274, 1024
        %s276 = scalar_lea.vmem [#allocation3], %s275
        %p277 = pneg %p200
        %p278 = pneg %p197
        %s279 = sand.u32 %s187, 1
        %s280 = scalar_lea.sflag [#allocation6], %s279
        %s281 = sand.u32 %s187, 1
        %s282 = smul.addr %s281, 2
        %s283 = scalar_lea.vmem [#allocation5], %s282
        %s284 = smul.u32 2, %s30
        %p285 = scmp.lt.s32.totalorder %s29, 1
        %s286 = scalar_select %p285, %s29, 1
        %p287 = scmp.lt.s32.totalorder %s284, 1
        %s288 = scalar_select %p287, %s284, 1
        %s289 = smul.addr %s286, 2
        %s290 = sadd.s32 %s288, %s289
        %s291 = smul.addr %s290, 2
        %s292 = scalar_lea.vmem %s0, %s291
        %s293 = smul.u32 2, %s30
        %s294 = smul.u32 2, %s30
        %s295 = smul.u32 2, %s30
        %v297 = vld [vmem:[%s1] sm:$0xf]
        %v298 = vld [vmem:[%s1 + $0x4] sm:$0xf]
        %v299 = vld [vmem:[%s1 + $0x8] sm:$0xf]
        %v300 = vld [vmem:[%s1 + $0xc] sm:$0xf]
        %v301 = vld [vmem:[%s1 + $0x10] sm:$0xf]
        %v302 = vld [vmem:[%s1 + $0x14] sm:$0xf]
        %v303 = vld [vmem:[%s1 + $0x18] sm:$0xf]
        %v304 = vld [vmem:[%s1 + $0x1c] sm:$0xf]
        %v305 = vld [vmem:[%s1 + $0x20] sm:$0xf]
        %v306 = vld [vmem:[%s1 + $0x24] sm:$0xf]
        %v307 = vld [vmem:[%s1 + $0x28] sm:$0xf]
        %v308 = vld [vmem:[%s1 + $0x2c] sm:$0xf]
        %v309 = vld [vmem:[%s1 + $0x30] sm:$0xf]
        %v310 = vld [vmem:[%s1 + $0x34] sm:$0xf]
        %v311 = vld [vmem:[%s1 + $0x38] sm:$0xf]
        %v312 = vld [vmem:[%s1 + $0x3c] sm:$0xf]
        %v313 = vld [vmem:[%s1 + $0x40] sm:$0xf]
        %v314 = vld [vmem:[%s1 + $0x44] sm:$0xf]
        %v315 = vld [vmem:[%s1 + $0x48] sm:$0xf]
        %v316 = vld [vmem:[%s1 + $0x4c] sm:$0xf]
        %v317 = vld [vmem:[%s1 + $0x50] sm:$0xf]
        %v318 = vld [vmem:[%s1 + $0x54] sm:$0xf]
        %v319 = vld [vmem:[%s1 + $0x58] sm:$0xf]
        %v320 = vld [vmem:[%s1 + $0x5c] sm:$0xf]
        %v321 = vld [vmem:[%s1 + $0x60] sm:$0xf]
        %v322 = vld [vmem:[%s1 + $0x64] sm:$0xf]
        %v323 = vld [vmem:[%s1 + $0x68] sm:$0xf]
        %v324 = vld [vmem:[%s1 + $0x6c] sm:$0xf]
        %v325 = vld [vmem:[%s1 + $0x70] sm:$0xf]
        %v326 = vld [vmem:[%s1 + $0x74] sm:$0xf]
        %v327 = vld [vmem:[%s1 + $0x78] sm:$0xf]
        %v328 = vld [vmem:[%s1 + $0x7c] sm:$0xf]
        %v329 = vld [vmem:[%s1 + $0x80] sm:$0xf]
        %v330 = vld [vmem:[%s1 + $0x84] sm:$0xf]
        %v331 = vld [vmem:[%s1 + $0x88] sm:$0xf]
        %v332 = vld [vmem:[%s1 + $0x8c] sm:$0xf]
        %v333 = vld [vmem:[%s1 + $0x90] sm:$0xf]
        %v334 = vld [vmem:[%s1 + $0x94] sm:$0xf]
        %v335 = vld [vmem:[%s1 + $0x98] sm:$0xf]
        %v336 = vld [vmem:[%s1 + $0x9c] sm:$0xf]
        %v337 = vld [vmem:[%s1 + $0xa0] sm:$0xf]
        %v338 = vld [vmem:[%s1 + $0xa4] sm:$0xf]
        %v339 = vld [vmem:[%s1 + $0xa8] sm:$0xf]
        %v340 = vld [vmem:[%s1 + $0xac] sm:$0xf]
        %v341 = vld [vmem:[%s1 + $0xb0] sm:$0xf]
        %v342 = vld [vmem:[%s1 + $0xb4] sm:$0xf]
        %v343 = vld [vmem:[%s1 + $0xb8] sm:$0xf]
        %v344 = vld [vmem:[%s1 + $0xbc] sm:$0xf]
        %v345 = vld [vmem:[%s1 + $0xc0] sm:$0xf]
        %v346 = vld [vmem:[%s1 + $0xc4] sm:$0xf]
        %v347 = vld [vmem:[%s1 + $0xc8] sm:$0xf]
        %v348 = vld [vmem:[%s1 + $0xcc] sm:$0xf]
        %v349 = vld [vmem:[%s1 + $0xd0] sm:$0xf]
        %v350 = vld [vmem:[%s1 + $0xd4] sm:$0xf]
        %v351 = vld [vmem:[%s1 + $0xd8] sm:$0xf]
        %v352 = vld [vmem:[%s1 + $0xdc] sm:$0xf]
        %v353 = vld [vmem:[%s1 + $0xe0] sm:$0xf]
        %v354 = vld [vmem:[%s1 + $0xe4] sm:$0xf]
        %v355 = vld [vmem:[%s1 + $0xe8] sm:$0xf]
        %v356 = vld [vmem:[%s1 + $0xec] sm:$0xf]
        %v357 = vld [vmem:[%s1 + $0xf0] sm:$0xf]
        %v358 = vld [vmem:[%s1 + $0xf4] sm:$0xf]
        %v359 = vld [vmem:[%s1 + $0xf8] sm:$0xf]
        %v360 = vld [vmem:[%s1 + $0xfc] sm:$0xf]
        %v361 = vld [vmem:[%s292] sm:$0xf]
        %v362 = vld [vmem:[%s2] sm:$0xff]
        %v363 = vld [vmem:[%s2 + $0x8] sm:$0xff]
        %v364 = vld [vmem:[%s2 + $0x10] sm:$0xff]
        %v365 = vld [vmem:[%s2 + $0x18] sm:$0xff]
        %v366 = vld [vmem:[%s2 + $0x20] sm:$0xff]
        %v367 = vld [vmem:[%s2 + $0x28] sm:$0xff]
        %v368 = vld [vmem:[%s2 + $0x30] sm:$0xff]
        %v369 = vld [vmem:[%s2 + $0x38] sm:$0xff]
        %v370 = vld [vmem:[%s2 + $0x40] sm:$0xff]
        %v371 = vld [vmem:[%s2 + $0x48] sm:$0xff]
        %v372 = vld [vmem:[%s2 + $0x50] sm:$0xff]
        %v373 = vld [vmem:[%s2 + $0x58] sm:$0xff]
        %v374 = vld [vmem:[%s2 + $0x60] sm:$0xff]
        %v375 = vld [vmem:[%s2 + $0x68] sm:$0xff]
        %v376 = vld [vmem:[%s2 + $0x70] sm:$0xff]
        %v377 = vld [vmem:[%s2 + $0x78] sm:$0xff]
        %v378 = vld [vmem:[%s2 + $0x80] sm:$0xff]
        %v379 = vld [vmem:[%s2 + $0x88] sm:$0xff]
        %v380 = vld [vmem:[%s2 + $0x90] sm:$0xff]
        %v381 = vld [vmem:[%s2 + $0x98] sm:$0xff]
        %v382 = vld [vmem:[%s2 + $0xa0] sm:$0xff]
        %v383 = vld [vmem:[%s2 + $0xa8] sm:$0xff]
        %v384 = vld [vmem:[%s2 + $0xb0] sm:$0xff]
        %v385 = vld [vmem:[%s2 + $0xb8] sm:$0xff]
        %v386 = vld [vmem:[%s2 + $0xc0] sm:$0xff]
        %v387 = vld [vmem:[%s2 + $0xc8] sm:$0xff]
        %v388 = vld [vmem:[%s2 + $0xd0] sm:$0xff]
        %v389 = vld [vmem:[%s2 + $0xd8] sm:$0xff]
        %v390 = vld [vmem:[%s2 + $0xe0] sm:$0xff]
        %v391 = vld [vmem:[%s2 + $0xe8] sm:$0xff]
        %v392 = vld [vmem:[%s2 + $0xf0] sm:$0xff]
        %v393 = vld [vmem:[%s2 + $0xf8] sm:$0xff]
        %v394 = vld [vmem:[%s2 + $0x100] sm:$0xff]
        %v395 = vld [vmem:[%s2 + $0x108] sm:$0xff]
        %v396 = vld [vmem:[%s2 + $0x110] sm:$0xff]
        %v397 = vld [vmem:[%s2 + $0x118] sm:$0xff]
        %v398 = vld [vmem:[%s2 + $0x120] sm:$0xff]
        %v399 = vld [vmem:[%s2 + $0x128] sm:$0xff]
        %v400 = vld [vmem:[%s2 + $0x130] sm:$0xff]
        %v401 = vld [vmem:[%s2 + $0x138] sm:$0xff]
        %v402 = vld [vmem:[%s2 + $0x140] sm:$0xff]
        %v403 = vld [vmem:[%s2 + $0x148] sm:$0xff]
        %v404 = vld [vmem:[%s2 + $0x150] sm:$0xff]
        %v405 = vld [vmem:[%s2 + $0x158] sm:$0xff]
        %v406 = vld [vmem:[%s2 + $0x160] sm:$0xff]
        %v407 = vld [vmem:[%s2 + $0x168] sm:$0xff]
        %v408 = vld [vmem:[%s2 + $0x170] sm:$0xff]
        %v409 = vld [vmem:[%s2 + $0x178] sm:$0xff]
        %v410 = vld [vmem:[%s2 + $0x180] sm:$0xff]
        %v411 = vld [vmem:[%s2 + $0x188] sm:$0xff]
        %v412 = vld [vmem:[%s2 + $0x190] sm:$0xff]
        %v413 = vld [vmem:[%s2 + $0x198] sm:$0xff]
        %v414 = vld [vmem:[%s2 + $0x1a0] sm:$0xff]
        %v415 = vld [vmem:[%s2 + $0x1a8] sm:$0xff]
        %v416 = vld [vmem:[%s2 + $0x1b0] sm:$0xff]
        %v417 = vld [vmem:[%s2 + $0x1b8] sm:$0xff]
        %v418 = vld [vmem:[%s2 + $0x1c0] sm:$0xff]
        %v419 = vld [vmem:[%s2 + $0x1c8] sm:$0xff]
        %v420 = vld [vmem:[%s2 + $0x1d0] sm:$0xff]
        %v421 = vld [vmem:[%s2 + $0x1d8] sm:$0xff]
        %v422 = vld [vmem:[%s2 + $0x1e0] sm:$0xff]
        %v423 = vld [vmem:[%s2 + $0x1e8] sm:$0xff]
        %v424 = vld [vmem:[%s2 + $0x1f0] sm:$0xff]
        %v425 = vld [vmem:[%s2 + $0x1f8] sm:$0xff]
        %427 = vset.pattern.permute.xlu0 0
        %428 = vperm.xlu0 %427, %v362
        %v429 = vpop.permute.xlu0 %428
        %432 = vset.pattern.permute.xlu0 0
        %433 = vperm.xlu0 %432, %v363
        %v434 = vpop.permute.xlu0 %433
        %437 = vset.pattern.permute.xlu0 0
        %438 = vperm.xlu0 %437, %v364
        %v439 = vpop.permute.xlu0 %438
        %442 = vset.pattern.permute.xlu0 0
        %443 = vperm.xlu0 %442, %v365
        %v444 = vpop.permute.xlu0 %443
        %447 = vset.pattern.permute.xlu0 0
        %448 = vperm.xlu0 %447, %v366
        %v449 = vpop.permute.xlu0 %448
        %452 = vset.pattern.permute.xlu0 0
        %453 = vperm.xlu0 %452, %v367
        %v454 = vpop.permute.xlu0 %453
        %457 = vset.pattern.permute.xlu0 0
        %458 = vperm.xlu0 %457, %v368
        %v459 = vpop.permute.xlu0 %458
        %462 = vset.pattern.permute.xlu0 0
        %463 = vperm.xlu0 %462, %v369
        %v464 = vpop.permute.xlu0 %463
        %467 = vset.pattern.permute.xlu0 0
        %468 = vperm.xlu0 %467, %v370
        %v469 = vpop.permute.xlu0 %468
        %472 = vset.pattern.permute.xlu0 0
        %473 = vperm.xlu0 %472, %v371
        %v474 = vpop.permute.xlu0 %473
        %477 = vset.pattern.permute.xlu0 0
        %478 = vperm.xlu0 %477, %v372
        %v479 = vpop.permute.xlu0 %478
        %482 = vset.pattern.permute.xlu0 0
        %483 = vperm.xlu0 %482, %v373
        %v484 = vpop.permute.xlu0 %483
        %487 = vset.pattern.permute.xlu0 0
        %488 = vperm.xlu0 %487, %v374
        %v489 = vpop.permute.xlu0 %488
        %492 = vset.pattern.permute.xlu0 0
        %493 = vperm.xlu0 %492, %v375
        %v494 = vpop.permute.xlu0 %493
        %497 = vset.pattern.permute.xlu0 0
        %498 = vperm.xlu0 %497, %v376
        %v499 = vpop.permute.xlu0 %498
        %502 = vset.pattern.permute.xlu0 0
        %503 = vperm.xlu0 %502, %v377
        %v504 = vpop.permute.xlu0 %503
        %507 = vset.pattern.permute.xlu0 0
        %508 = vperm.xlu0 %507, %v378
        %v509 = vpop.permute.xlu0 %508
        %512 = vset.pattern.permute.xlu0 0
        %513 = vperm.xlu0 %512, %v379
        %v514 = vpop.permute.xlu0 %513
        %517 = vset.pattern.permute.xlu0 0
        %518 = vperm.xlu0 %517, %v380
        %v519 = vpop.permute.xlu0 %518
        %522 = vset.pattern.permute.xlu0 0
        %523 = vperm.xlu0 %522, %v381
        %v524 = vpop.permute.xlu0 %523
        %527 = vset.pattern.permute.xlu0 0
        %528 = vperm.xlu0 %527, %v382
        %v529 = vpop.permute.xlu0 %528
        %532 = vset.pattern.permute.xlu0 0
        %533 = vperm.xlu0 %532, %v383
        %v534 = vpop.permute.xlu0 %533
        %537 = vset.pattern.permute.xlu0 0
        %538 = vperm.xlu0 %537, %v384
        %v539 = vpop.permute.xlu0 %538
        %542 = vset.pattern.permute.xlu0 0
        %543 = vperm.xlu0 %542, %v385
        %v544 = vpop.permute.xlu0 %543
        %547 = vset.pattern.permute.xlu0 0
        %548 = vperm.xlu0 %547, %v386
        %v549 = vpop.permute.xlu0 %548
        %552 = vset.pattern.permute.xlu0 0
        %553 = vperm.xlu0 %552, %v387
        %v554 = vpop.permute.xlu0 %553
        %557 = vset.pattern.permute.xlu0 0
        %558 = vperm.xlu0 %557, %v388
        %v559 = vpop.permute.xlu0 %558
        %562 = vset.pattern.permute.xlu0 0
        %563 = vperm.xlu0 %562, %v389
        %v564 = vpop.permute.xlu0 %563
        %567 = vset.pattern.permute.xlu0 0
        %568 = vperm.xlu0 %567, %v390
        %v569 = vpop.permute.xlu0 %568
        %572 = vset.pattern.permute.xlu0 0
        %573 = vperm.xlu0 %572, %v391
        %v574 = vpop.permute.xlu0 %573
        %577 = vset.pattern.permute.xlu0 0
        %578 = vperm.xlu0 %577, %v392
        %v579 = vpop.permute.xlu0 %578
        %582 = vset.pattern.permute.xlu0 0
        %583 = vperm.xlu0 %582, %v393
        %v584 = vpop.permute.xlu0 %583
        %587 = vset.pattern.permute.xlu0 0
        %588 = vperm.xlu0 %587, %v394
        %v589 = vpop.permute.xlu0 %588
        %592 = vset.pattern.permute.xlu0 0
        %593 = vperm.xlu0 %592, %v395
        %v594 = vpop.permute.xlu0 %593
        %597 = vset.pattern.permute.xlu0 0
        %598 = vperm.xlu0 %597, %v396
        %v599 = vpop.permute.xlu0 %598
        %602 = vset.pattern.permute.xlu0 0
        %603 = vperm.xlu0 %602, %v397
        %v604 = vpop.permute.xlu0 %603
        %607 = vset.pattern.permute.xlu0 0
        %608 = vperm.xlu0 %607, %v398
        %v609 = vpop.permute.xlu0 %608
        %612 = vset.pattern.permute.xlu0 0
        %613 = vperm.xlu0 %612, %v399
        %v614 = vpop.permute.xlu0 %613
        %617 = vset.pattern.permute.xlu0 0
        %618 = vperm.xlu0 %617, %v400
        %v619 = vpop.permute.xlu0 %618
        %622 = vset.pattern.permute.xlu0 0
        %623 = vperm.xlu0 %622, %v401
        %v624 = vpop.permute.xlu0 %623
        %627 = vset.pattern.permute.xlu0 0
        %628 = vperm.xlu0 %627, %v402
        %v629 = vpop.permute.xlu0 %628
        %632 = vset.pattern.permute.xlu0 0
        %633 = vperm.xlu0 %632, %v403
        %v634 = vpop.permute.xlu0 %633
        %637 = vset.pattern.permute.xlu0 0
        %638 = vperm.xlu0 %637, %v404
        %v639 = vpop.permute.xlu0 %638
        %642 = vset.pattern.permute.xlu0 0
        %643 = vperm.xlu0 %642, %v405
        %v644 = vpop.permute.xlu0 %643
        %647 = vset.pattern.permute.xlu0 0
        %648 = vperm.xlu0 %647, %v406
        %v649 = vpop.permute.xlu0 %648
        %652 = vset.pattern.permute.xlu0 0
        %653 = vperm.xlu0 %652, %v407
        %v654 = vpop.permute.xlu0 %653
        %657 = vset.pattern.permute.xlu0 0
        %658 = vperm.xlu0 %657, %v408
        %v659 = vpop.permute.xlu0 %658
        %662 = vset.pattern.permute.xlu0 0
        %663 = vperm.xlu0 %662, %v409
        %v664 = vpop.permute.xlu0 %663
        %667 = vset.pattern.permute.xlu0 0
        %668 = vperm.xlu0 %667, %v410
        %v669 = vpop.permute.xlu0 %668
        %672 = vset.pattern.permute.xlu0 0
        %673 = vperm.xlu0 %672, %v411
        %v674 = vpop.permute.xlu0 %673
        %677 = vset.pattern.permute.xlu0 0
        %678 = vperm.xlu0 %677, %v412
        %v679 = vpop.permute.xlu0 %678
        %682 = vset.pattern.permute.xlu0 0
        %683 = vperm.xlu0 %682, %v413
        %v684 = vpop.permute.xlu0 %683
        %687 = vset.pattern.permute.xlu0 0
        %688 = vperm.xlu0 %687, %v414
        %v689 = vpop.permute.xlu0 %688
        %692 = vset.pattern.permute.xlu0 0
        %693 = vperm.xlu0 %692, %v415
        %v694 = vpop.permute.xlu0 %693
        %697 = vset.pattern.permute.xlu0 0
        %698 = vperm.xlu0 %697, %v416
        %v699 = vpop.permute.xlu0 %698
        %702 = vset.pattern.permute.xlu0 0
        %703 = vperm.xlu0 %702, %v417
        %v704 = vpop.permute.xlu0 %703
        %707 = vset.pattern.permute.xlu0 0
        %708 = vperm.xlu0 %707, %v418
        %v709 = vpop.permute.xlu0 %708
        %712 = vset.pattern.permute.xlu0 0
        %713 = vperm.xlu0 %712, %v419
        %v714 = vpop.permute.xlu0 %713
        %717 = vset.pattern.permute.xlu0 0
        %718 = vperm.xlu0 %717, %v420
        %v719 = vpop.permute.xlu0 %718
        %722 = vset.pattern.permute.xlu0 0
        %723 = vperm.xlu0 %722, %v421
        %v724 = vpop.permute.xlu0 %723
        %727 = vset.pattern.permute.xlu0 0
        %728 = vperm.xlu0 %727, %v422
        %v729 = vpop.permute.xlu0 %728
        %732 = vset.pattern.permute.xlu0 0
        %733 = vperm.xlu0 %732, %v423
        %v734 = vpop.permute.xlu0 %733
        %737 = vset.pattern.permute.xlu0 0
        %738 = vperm.xlu0 %737, %v424
        %v739 = vpop.permute.xlu0 %738
        %742 = vset.pattern.permute.xlu0 0
        %743 = vperm.xlu0 %742, %v425
        %v744 = vpop.permute.xlu0 %743
        %v810 = vunpack.c.l.b16 %v297
        %v811 = vunpack.c.l.b16 %v298
        %v812 = vunpack.c.l.b16 %v299
        %v813 = vunpack.c.l.b16 %v300
        %v814 = vunpack.c.l.b16 %v301
        %v815 = vunpack.c.l.b16 %v302
        %v816 = vunpack.c.l.b16 %v303
        %v817 = vunpack.c.l.b16 %v304
        %v818 = vunpack.c.l.b16 %v305
        %v819 = vunpack.c.l.b16 %v306
        %v820 = vunpack.c.l.b16 %v307
        %v821 = vunpack.c.l.b16 %v308
        %v822 = vunpack.c.l.b16 %v309
        %v823 = vunpack.c.l.b16 %v310
        %v824 = vunpack.c.l.b16 %v311
        %v825 = vunpack.c.l.b16 %v312
        %v826 = vunpack.c.l.b16 %v313
        %v827 = vunpack.c.l.b16 %v314
        %v828 = vunpack.c.l.b16 %v315
        %v829 = vunpack.c.l.b16 %v316
        %v830 = vunpack.c.l.b16 %v317
        %v831 = vunpack.c.l.b16 %v318
        %v832 = vunpack.c.l.b16 %v319
        %v833 = vunpack.c.l.b16 %v320
        %v834 = vunpack.c.l.b16 %v321
        %v835 = vunpack.c.l.b16 %v322
        %v836 = vunpack.c.l.b16 %v323
        %v837 = vunpack.c.l.b16 %v324
        %v838 = vunpack.c.l.b16 %v325
        %v839 = vunpack.c.l.b16 %v326
        %v840 = vunpack.c.l.b16 %v327
        %v841 = vunpack.c.l.b16 %v328
        %v842 = vunpack.c.l.b16 %v329
        %v843 = vunpack.c.l.b16 %v330
        %v844 = vunpack.c.l.b16 %v331
        %v845 = vunpack.c.l.b16 %v332
        %v846 = vunpack.c.l.b16 %v333
        %v847 = vunpack.c.l.b16 %v334
        %v848 = vunpack.c.l.b16 %v335
        %v849 = vunpack.c.l.b16 %v336
        %v850 = vunpack.c.l.b16 %v337
        %v851 = vunpack.c.l.b16 %v338
        %v852 = vunpack.c.l.b16 %v339
        %v853 = vunpack.c.l.b16 %v340
        %v854 = vunpack.c.l.b16 %v341
        %v855 = vunpack.c.l.b16 %v342
        %v856 = vunpack.c.l.b16 %v343
        %v857 = vunpack.c.l.b16 %v344
        %v858 = vunpack.c.l.b16 %v345
        %v859 = vunpack.c.l.b16 %v346
        %v860 = vunpack.c.l.b16 %v347
        %v861 = vunpack.c.l.b16 %v348
        %v862 = vunpack.c.l.b16 %v349
        %v863 = vunpack.c.l.b16 %v350
        %v864 = vunpack.c.l.b16 %v351
        %v865 = vunpack.c.l.b16 %v352
        %v866 = vunpack.c.l.b16 %v353
        %v867 = vunpack.c.l.b16 %v354
        %v868 = vunpack.c.l.b16 %v355
        %v869 = vunpack.c.l.b16 %v356
        %v870 = vunpack.c.l.b16 %v357
        %v871 = vunpack.c.l.b16 %v358
        %v872 = vunpack.c.l.b16 %v359
        %v873 = vunpack.c.l.b16 %v360
        %v874 = vpack.c.b16 %v811, %v810
        %v875 = vpack.c.b16 %v813, %v812
        %v876 = vpack.c.b16 %v815, %v814
        %v877 = vpack.c.b16 %v817, %v816
        %v878 = vpack.c.b16 %v819, %v818
        %v879 = vpack.c.b16 %v821, %v820
        %v880 = vpack.c.b16 %v823, %v822
        %v881 = vpack.c.b16 %v825, %v824
        %v882 = vpack.c.b16 %v827, %v826
        %v883 = vpack.c.b16 %v829, %v828
        %v884 = vpack.c.b16 %v831, %v830
        %v885 = vpack.c.b16 %v833, %v832
        %v886 = vpack.c.b16 %v835, %v834
        %v887 = vpack.c.b16 %v837, %v836
        %v888 = vpack.c.b16 %v839, %v838
        %v889 = vpack.c.b16 %v841, %v840
        %v890 = vpack.c.b16 %v843, %v842
        %v891 = vpack.c.b16 %v845, %v844
        %v892 = vpack.c.b16 %v847, %v846
        %v893 = vpack.c.b16 %v849, %v848
        %v894 = vpack.c.b16 %v851, %v850
        %v895 = vpack.c.b16 %v853, %v852
        %v896 = vpack.c.b16 %v855, %v854
        %v897 = vpack.c.b16 %v857, %v856
        %v898 = vpack.c.b16 %v859, %v858
        %v899 = vpack.c.b16 %v861, %v860
        %v900 = vpack.c.b16 %v863, %v862
        %v901 = vpack.c.b16 %v865, %v864
        %v902 = vpack.c.b16 %v867, %v866
        %v903 = vpack.c.b16 %v869, %v868
        %v904 = vpack.c.b16 %v871, %v870
        %v905 = vpack.c.b16 %v873, %v872
        %907 = vst [vmem:[#allocation1] ss:$4 sm:$0xff] %v361
        %v908 = vld.sshfl [vmem:[#allocation1] sm:$0xff pattern:$0x73625140]
        %v909 = vld.sshfl [vmem:[#allocation1 + $0x8] sm:$0xff pattern:$0x73625140]
        %vm910 = vcmask 31744
        %v912 = vsel %vm910, %v874, 0
        %v915 = vsel %vm910, %v875, 0
        %v918 = vsel %vm910, %v876, 0
        %v921 = vsel %vm910, %v877, 0
        %v924 = vsel %vm910, %v878, 0
        %v927 = vsel %vm910, %v879, 0
        %v930 = vsel %vm910, %v880, 0
        %v933 = vsel %vm910, %v881, 0
        %v936 = vsel %vm910, %v882, 0
        %v939 = vsel %vm910, %v883, 0
        %v942 = vsel %vm910, %v884, 0
        %v945 = vsel %vm910, %v885, 0
        %v948 = vsel %vm910, %v886, 0
        %v951 = vsel %vm910, %v887, 0
        %v954 = vsel %vm910, %v888, 0
        %v957 = vsel %vm910, %v889, 0
        %v960 = vsel %vm910, %v890, 0
        %v963 = vsel %vm910, %v891, 0
        %v966 = vsel %vm910, %v892, 0
        %v969 = vsel %vm910, %v893, 0
        %v972 = vsel %vm910, %v894, 0
        %v975 = vsel %vm910, %v895, 0
        %v978 = vsel %vm910, %v896, 0
        %v981 = vsel %vm910, %v897, 0
        %v984 = vsel %vm910, %v898, 0
        %v987 = vsel %vm910, %v899, 0
        %v990 = vsel %vm910, %v900, 0
        %v993 = vsel %vm910, %v901, 0
        %v996 = vsel %vm910, %v902, 0
        %v999 = vsel %vm910, %v903, 0
        %v1002 = vsel %vm910, %v904, 0
        %v1005 = vsel %vm910, %v905, 0
        %vm1007 = vcmask 1041408
        %v1008 = vsel %vm1007, %v908, 0
        %v1010 = vsel %vm1007, %v909, 0
        %1012 = vmatpush.bf16.msra.mxu0 0
        %1013 = vmatpush.bf16.msra.mxu0 0
        %1014 = vmatpush.bf16.msra.mxu0 0
        %1015 = vmatpush.bf16.msra.mxu0 0
        %1016 = vmatpush.bf16.msra.mxu0 0
        %1017 = vmatpush.bf16.msra.mxu0 0
        %1018 = vmatpush.bf16.msra.mxu0 0
        %1019 = vmatpush.bf16.msra.mxu0 %v1008
        %1020 = vmatmul.bf16.gmra.mxu0 %v912
        %v1021 = vpop.f32.mrf.mxu0
        %v1022 = vadd.f32 %v429, %v1021
        %v1023 = vpop.f32.mrf.mxu0
        %v1024 = vadd.f32 %v434, %v1023
        %1025 = vmatmul.bf16.gmra.mxu0 %v915
        %v1026 = vpop.f32.mrf.mxu0
        %v1027 = vadd.f32 %v439, %v1026
        %v1028 = vpop.f32.mrf.mxu0
        %v1029 = vadd.f32 %v444, %v1028
        %1030 = vmatmul.bf16.gmra.mxu0 %v918
        %v1031 = vpop.f32.mrf.mxu0
        %v1032 = vadd.f32 %v449, %v1031
        %v1033 = vpop.f32.mrf.mxu0
        %v1034 = vadd.f32 %v454, %v1033
        %1035 = vmatmul.bf16.gmra.mxu0 %v921
        %v1036 = vpop.f32.mrf.mxu0
        %v1037 = vadd.f32 %v459, %v1036
        %v1038 = vpop.f32.mrf.mxu0
        %v1039 = vadd.f32 %v464, %v1038
        %1040 = vmatmul.bf16.gmra.mxu0 %v924
        %v1041 = vpop.f32.mrf.mxu0
        %v1042 = vadd.f32 %v469, %v1041
        %v1043 = vpop.f32.mrf.mxu0
        %v1044 = vadd.f32 %v474, %v1043
        %1045 = vmatmul.bf16.gmra.mxu0 %v927
        %v1046 = vpop.f32.mrf.mxu0
        %v1047 = vadd.f32 %v479, %v1046
        %v1048 = vpop.f32.mrf.mxu0
        %v1049 = vadd.f32 %v484, %v1048
        %1050 = vmatmul.bf16.gmra.mxu0 %v930
        %v1051 = vpop.f32.mrf.mxu0
        %v1052 = vadd.f32 %v489, %v1051
        %v1053 = vpop.f32.mrf.mxu0
        %v1054 = vadd.f32 %v494, %v1053
        %1055 = vmatmul.bf16.gmra.mxu0 %v933
        %v1056 = vpop.f32.mrf.mxu0
        %v1057 = vadd.f32 %v499, %v1056
        %v1058 = vpop.f32.mrf.mxu0
        %v1059 = vadd.f32 %v504, %v1058
        %1060 = vmatmul.bf16.gmra.mxu0 %v936
        %v1061 = vpop.f32.mrf.mxu0
        %v1062 = vadd.f32 %v509, %v1061
        %v1063 = vpop.f32.mrf.mxu0
        %v1064 = vadd.f32 %v514, %v1063
        %1065 = vmatmul.bf16.gmra.mxu0 %v939
        %v1066 = vpop.f32.mrf.mxu0
        %v1067 = vadd.f32 %v519, %v1066
        %v1068 = vpop.f32.mrf.mxu0
        %v1069 = vadd.f32 %v524, %v1068
        %1070 = vmatmul.bf16.gmra.mxu0 %v942
        %v1071 = vpop.f32.mrf.mxu0
        %v1072 = vadd.f32 %v529, %v1071
        %v1073 = vpop.f32.mrf.mxu0
        %v1074 = vadd.f32 %v534, %v1073
        %1075 = vmatmul.bf16.gmra.mxu0 %v945
        %v1076 = vpop.f32.mrf.mxu0
        %v1077 = vadd.f32 %v539, %v1076
        %v1078 = vpop.f32.mrf.mxu0
        %v1079 = vadd.f32 %v544, %v1078
        %1080 = vmatmul.bf16.gmra.mxu0 %v948
        %v1081 = vpop.f32.mrf.mxu0
        %v1082 = vadd.f32 %v549, %v1081
        %v1083 = vpop.f32.mrf.mxu0
        %v1084 = vadd.f32 %v554, %v1083
        %1085 = vmatmul.bf16.gmra.mxu0 %v951
        %v1086 = vpop.f32.mrf.mxu0
        %v1087 = vadd.f32 %v559, %v1086
        %v1088 = vpop.f32.mrf.mxu0
        %v1089 = vadd.f32 %v564, %v1088
        %1090 = vmatmul.bf16.gmra.mxu0 %v954
        %v1091 = vpop.f32.mrf.mxu0
        %v1092 = vadd.f32 %v569, %v1091
        %v1093 = vpop.f32.mrf.mxu0
        %v1094 = vadd.f32 %v574, %v1093
        %1095 = vmatmul.bf16.gmra.mxu0 %v957
        %v1096 = vpop.f32.mrf.mxu0
        %v1097 = vadd.f32 %v579, %v1096
        %v1098 = vpop.f32.mrf.mxu0
        %v1099 = vadd.f32 %v584, %v1098
        %1100 = vmatmul.bf16.gmra.mxu0 %v960
        %v1101 = vpop.f32.mrf.mxu0
        %v1102 = vadd.f32 %v589, %v1101
        %v1103 = vpop.f32.mrf.mxu0
        %v1104 = vadd.f32 %v594, %v1103
        %1105 = vmatmul.bf16.gmra.mxu0 %v963
        %v1106 = vpop.f32.mrf.mxu0
        %v1107 = vadd.f32 %v599, %v1106
        %v1108 = vpop.f32.mrf.mxu0
        %v1109 = vadd.f32 %v604, %v1108
        %1110 = vmatmul.bf16.gmra.mxu0 %v966
        %v1111 = vpop.f32.mrf.mxu0
        %v1112 = vadd.f32 %v609, %v1111
        %v1113 = vpop.f32.mrf.mxu0
        %v1114 = vadd.f32 %v614, %v1113
        %1115 = vmatmul.bf16.gmra.mxu0 %v969
        %v1116 = vpop.f32.mrf.mxu0
        %v1117 = vadd.f32 %v619, %v1116
        %v1118 = vpop.f32.mrf.mxu0
        %v1119 = vadd.f32 %v624, %v1118
        %1120 = vmatmul.bf16.gmra.mxu0 %v972
        %v1121 = vpop.f32.mrf.mxu0
        %v1122 = vadd.f32 %v629, %v1121
        %v1123 = vpop.f32.mrf.mxu0
        %v1124 = vadd.f32 %v634, %v1123
        %1125 = vmatmul.bf16.gmra.mxu0 %v975
        %v1126 = vpop.f32.mrf.mxu0
        %v1127 = vadd.f32 %v639, %v1126
        %v1128 = vpop.f32.mrf.mxu0
        %v1129 = vadd.f32 %v644, %v1128
        %1130 = vmatmul.bf16.gmra.mxu0 %v978
        %v1131 = vpop.f32.mrf.mxu0
        %v1132 = vadd.f32 %v649, %v1131
        %v1133 = vpop.f32.mrf.mxu0
        %v1134 = vadd.f32 %v654, %v1133
        %1135 = vmatmul.bf16.gmra.mxu0 %v981
        %v1136 = vpop.f32.mrf.mxu0
        %v1137 = vadd.f32 %v659, %v1136
        %v1138 = vpop.f32.mrf.mxu0
        %v1139 = vadd.f32 %v664, %v1138
        %1140 = vmatmul.bf16.gmra.mxu0 %v984
        %v1141 = vpop.f32.mrf.mxu0
        %v1142 = vadd.f32 %v669, %v1141
        %v1143 = vpop.f32.mrf.mxu0
        %v1144 = vadd.f32 %v674, %v1143
        %1145 = vmatmul.bf16.gmra.mxu0 %v987
        %v1146 = vpop.f32.mrf.mxu0
        %v1147 = vadd.f32 %v679, %v1146
        %v1148 = vpop.f32.mrf.mxu0
        %v1149 = vadd.f32 %v684, %v1148
        %1150 = vmatmul.bf16.gmra.mxu0 %v990
        %v1151 = vpop.f32.mrf.mxu0
        %v1152 = vadd.f32 %v689, %v1151
        %v1153 = vpop.f32.mrf.mxu0
        %v1154 = vadd.f32 %v694, %v1153
        %1155 = vmatmul.bf16.gmra.mxu0 %v993
        %v1156 = vpop.f32.mrf.mxu0
        %v1157 = vadd.f32 %v699, %v1156
        %v1158 = vpop.f32.mrf.mxu0
        %v1159 = vadd.f32 %v704, %v1158
        %1160 = vmatmul.bf16.gmra.mxu0 %v996
        %v1161 = vpop.f32.mrf.mxu0
        %v1162 = vadd.f32 %v709, %v1161
        %v1163 = vpop.f32.mrf.mxu0
        %v1164 = vadd.f32 %v714, %v1163
        %1165 = vmatmul.bf16.gmra.mxu0 %v999
        %v1166 = vpop.f32.mrf.mxu0
        %v1167 = vadd.f32 %v719, %v1166
        %v1168 = vpop.f32.mrf.mxu0
        %v1169 = vadd.f32 %v724, %v1168
        %1170 = vmatmul.bf16.gmra.mxu0 %v1002
        %v1171 = vpop.f32.mrf.mxu0
        %v1172 = vadd.f32 %v729, %v1171
        %v1173 = vpop.f32.mrf.mxu0
        %v1174 = vadd.f32 %v734, %v1173
        %1175 = vmatmul.bf16.gmra.mxu0 %v1005
        %v1176 = vpop.f32.mrf.mxu0
        %v1177 = vadd.f32 %v739, %v1176
        %v1178 = vpop.f32.mrf.mxu0
        %v1179 = vadd.f32 %v744, %v1178
        %1180 = vdwg.mxu0
        %1181 = vmatpush.bf16.msra.mxu0 0
        %1182 = vmatpush.bf16.msra.mxu0 0
        %1183 = vmatpush.bf16.msra.mxu0 0
        %1184 = vmatpush.bf16.msra.mxu0 0
        %1185 = vmatpush.bf16.msra.mxu0 0
        %1186 = vmatpush.bf16.msra.mxu0 0
        %1187 = vmatpush.bf16.msra.mxu0 0
        %1188 = vmatpush.bf16.msra.mxu0 %v1010
        %1189 = vmatmul.bf16.gmra.mxu0 %v912
        %v1190 = vpop.f32.mrf.mxu0
        %v1191 = vadd.f32 %v429, %v1190
        %v1192 = vpop.f32.mrf.mxu0
        %v1193 = vadd.f32 %v434, %v1192
        %1194 = vmatmul.bf16.gmra.mxu0 %v915
        %v1195 = vpop.f32.mrf.mxu0
        %v1196 = vadd.f32 %v439, %v1195
        %v1197 = vpop.f32.mrf.mxu0
        %v1198 = vadd.f32 %v444, %v1197
        %1199 = vmatmul.bf16.gmra.mxu0 %v918
        %v1200 = vpop.f32.mrf.mxu0
        %v1201 = vadd.f32 %v449, %v1200
        %v1202 = vpop.f32.mrf.mxu0
        %v1203 = vadd.f32 %v454, %v1202
        %1204 = vmatmul.bf16.gmra.mxu0 %v921
        %v1205 = vpop.f32.mrf.mxu0
        %v1206 = vadd.f32 %v459, %v1205
        %v1207 = vpop.f32.mrf.mxu0
        %v1208 = vadd.f32 %v464, %v1207
        %1209 = vmatmul.bf16.gmra.mxu0 %v924
        %v1210 = vpop.f32.mrf.mxu0
        %v1211 = vadd.f32 %v469, %v1210
        %v1212 = vpop.f32.mrf.mxu0
        %v1213 = vadd.f32 %v474, %v1212
        %1214 = vmatmul.bf16.gmra.mxu0 %v927
        %v1215 = vpop.f32.mrf.mxu0
        %v1216 = vadd.f32 %v479, %v1215
        %v1217 = vpop.f32.mrf.mxu0
        %v1218 = vadd.f32 %v484, %v1217
        %1219 = vmatmul.bf16.gmra.mxu0 %v930
        %v1220 = vpop.f32.mrf.mxu0
        %v1221 = vadd.f32 %v489, %v1220
        %v1222 = vpop.f32.mrf.mxu0
        %v1223 = vadd.f32 %v494, %v1222
        %1224 = vmatmul.bf16.gmra.mxu0 %v933
        %v1225 = vpop.f32.mrf.mxu0
        %v1226 = vadd.f32 %v499, %v1225
        %v1227 = vpop.f32.mrf.mxu0
        %v1228 = vadd.f32 %v504, %v1227
        %1229 = vmatmul.bf16.gmra.mxu0 %v936
        %v1230 = vpop.f32.mrf.mxu0
        %v1231 = vadd.f32 %v509, %v1230
        %v1232 = vpop.f32.mrf.mxu0
        %v1233 = vadd.f32 %v514, %v1232
        %1234 = vmatmul.bf16.gmra.mxu0 %v939
        %v1235 = vpop.f32.mrf.mxu0
        %v1236 = vadd.f32 %v519, %v1235
        %v1237 = vpop.f32.mrf.mxu0
        %v1238 = vadd.f32 %v524, %v1237
        %1239 = vmatmul.bf16.gmra.mxu0 %v942
        %v1240 = vpop.f32.mrf.mxu0
        %v1241 = vadd.f32 %v529, %v1240
        %v1242 = vpop.f32.mrf.mxu0
        %v1243 = vadd.f32 %v534, %v1242
        %1244 = vmatmul.bf16.gmra.mxu0 %v945
        %v1245 = vpop.f32.mrf.mxu0
        %v1246 = vadd.f32 %v539, %v1245
        %v1247 = vpop.f32.mrf.mxu0
        %v1248 = vadd.f32 %v544, %v1247
        %1249 = vmatmul.bf16.gmra.mxu0 %v948
        %v1250 = vpop.f32.mrf.mxu0
        %v1251 = vadd.f32 %v549, %v1250
        %v1252 = vpop.f32.mrf.mxu0
        %v1253 = vadd.f32 %v554, %v1252
        %1254 = vmatmul.bf16.gmra.mxu0 %v951
        %v1255 = vpop.f32.mrf.mxu0
        %v1256 = vadd.f32 %v559, %v1255
        %v1257 = vpop.f32.mrf.mxu0
        %v1258 = vadd.f32 %v564, %v1257
        %1259 = vmatmul.bf16.gmra.mxu0 %v954
        %v1260 = vpop.f32.mrf.mxu0
        %v1261 = vadd.f32 %v569, %v1260
        %v1262 = vpop.f32.mrf.mxu0
        %v1263 = vadd.f32 %v574, %v1262
        %1264 = vmatmul.bf16.gmra.mxu0 %v957
        %v1265 = vpop.f32.mrf.mxu0
        %v1266 = vadd.f32 %v579, %v1265
        %v1267 = vpop.f32.mrf.mxu0
        %v1268 = vadd.f32 %v584, %v1267
        %1269 = vmatmul.bf16.gmra.mxu0 %v960
        %v1270 = vpop.f32.mrf.mxu0
        %v1271 = vadd.f32 %v589, %v1270
        %v1272 = vpop.f32.mrf.mxu0
        %v1273 = vadd.f32 %v594, %v1272
        %1274 = vmatmul.bf16.gmra.mxu0 %v963
        %v1275 = vpop.f32.mrf.mxu0
        %v1276 = vadd.f32 %v599, %v1275
        %v1277 = vpop.f32.mrf.mxu0
        %v1278 = vadd.f32 %v604, %v1277
        %1279 = vmatmul.bf16.gmra.mxu0 %v966
        %v1280 = vpop.f32.mrf.mxu0
        %v1281 = vadd.f32 %v609, %v1280
        %v1282 = vpop.f32.mrf.mxu0
        %v1283 = vadd.f32 %v614, %v1282
        %1284 = vmatmul.bf16.gmra.mxu0 %v969
        %v1285 = vpop.f32.mrf.mxu0
        %v1286 = vadd.f32 %v619, %v1285
        %v1287 = vpop.f32.mrf.mxu0
        %v1288 = vadd.f32 %v624, %v1287
        %1289 = vmatmul.bf16.gmra.mxu0 %v972
        %v1290 = vpop.f32.mrf.mxu0
        %v1291 = vadd.f32 %v629, %v1290
        %v1292 = vpop.f32.mrf.mxu0
        %v1293 = vadd.f32 %v634, %v1292
        %1294 = vmatmul.bf16.gmra.mxu0 %v975
        %v1295 = vpop.f32.mrf.mxu0
        %v1296 = vadd.f32 %v639, %v1295
        %v1297 = vpop.f32.mrf.mxu0
        %v1298 = vadd.f32 %v644, %v1297
        %1299 = vmatmul.bf16.gmra.mxu0 %v978
        %v1300 = vpop.f32.mrf.mxu0
        %v1301 = vadd.f32 %v649, %v1300
        %v1302 = vpop.f32.mrf.mxu0
        %v1303 = vadd.f32 %v654, %v1302
        %1304 = vmatmul.bf16.gmra.mxu0 %v981
        %v1305 = vpop.f32.mrf.mxu0
        %v1306 = vadd.f32 %v659, %v1305
        %v1307 = vpop.f32.mrf.mxu0
        %v1308 = vadd.f32 %v664, %v1307
        %1309 = vmatmul.bf16.gmra.mxu0 %v984
        %v1310 = vpop.f32.mrf.mxu0
        %v1311 = vadd.f32 %v669, %v1310
        %v1312 = vpop.f32.mrf.mxu0
        %v1313 = vadd.f32 %v674, %v1312
        %1314 = vmatmul.bf16.gmra.mxu0 %v987
        %v1315 = vpop.f32.mrf.mxu0
        %v1316 = vadd.f32 %v679, %v1315
        %v1317 = vpop.f32.mrf.mxu0
        %v1318 = vadd.f32 %v684, %v1317
        %1319 = vmatmul.bf16.gmra.mxu0 %v990
        %v1320 = vpop.f32.mrf.mxu0
        %v1321 = vadd.f32 %v689, %v1320
        %v1322 = vpop.f32.mrf.mxu0
        %v1323 = vadd.f32 %v694, %v1322
        %1324 = vmatmul.bf16.gmra.mxu0 %v993
        %v1325 = vpop.f32.mrf.mxu0
        %v1326 = vadd.f32 %v699, %v1325
        %v1327 = vpop.f32.mrf.mxu0
        %v1328 = vadd.f32 %v704, %v1327
        %1329 = vmatmul.bf16.gmra.mxu0 %v996
        %v1330 = vpop.f32.mrf.mxu0
        %v1331 = vadd.f32 %v709, %v1330
        %v1332 = vpop.f32.mrf.mxu0
        %v1333 = vadd.f32 %v714, %v1332
        %1334 = vmatmul.bf16.gmra.mxu0 %v999
        %v1335 = vpop.f32.mrf.mxu0
        %v1336 = vadd.f32 %v719, %v1335
        %v1337 = vpop.f32.mrf.mxu0
        %v1338 = vadd.f32 %v724, %v1337
        %1339 = vmatmul.bf16.gmra.mxu0 %v1002
        %v1340 = vpop.f32.mrf.mxu0
        %v1341 = vadd.f32 %v729, %v1340
        %v1342 = vpop.f32.mrf.mxu0
        %v1343 = vadd.f32 %v734, %v1342
        %1344 = vmatmul.bf16.gmra.mxu0 %v1005
        %v1345 = vpop.f32.mrf.mxu0
        %v1346 = vadd.f32 %v739, %v1345
        %v1347 = vpop.f32.mrf.mxu0
        %v1348 = vadd.f32 %v744, %v1347
        %1349 = vdwg.mxu0
        %v1350 = vmul.f32 %v1022, %v1022
        %v1351 = vmul.f32 %v1191, %v1191
        %v1352 = vmul.f32 %v1024, %v1024
        %v1353 = vmul.f32 %v1193, %v1193
        %v1354 = vmul.f32 %v1027, %v1027
        %v1355 = vmul.f32 %v1196, %v1196
        %v1356 = vmul.f32 %v1029, %v1029
        %v1357 = vmul.f32 %v1198, %v1198
        %v1358 = vmul.f32 %v1032, %v1032
        %v1359 = vmul.f32 %v1201, %v1201
        %v1360 = vmul.f32 %v1034, %v1034
        %v1361 = vmul.f32 %v1203, %v1203
        %v1362 = vmul.f32 %v1037, %v1037
        %v1363 = vmul.f32 %v1206, %v1206
        %v1364 = vmul.f32 %v1039, %v1039
        %v1365 = vmul.f32 %v1208, %v1208
        %v1366 = vmul.f32 %v1042, %v1042
        %v1367 = vmul.f32 %v1211, %v1211
        %v1368 = vmul.f32 %v1044, %v1044
        %v1369 = vmul.f32 %v1213, %v1213
        %v1370 = vmul.f32 %v1047, %v1047
        %v1371 = vmul.f32 %v1216, %v1216
        %v1372 = vmul.f32 %v1049, %v1049
        %v1373 = vmul.f32 %v1218, %v1218
        %v1374 = vmul.f32 %v1052, %v1052
        %v1375 = vmul.f32 %v1221, %v1221
        %v1376 = vmul.f32 %v1054, %v1054
        %v1377 = vmul.f32 %v1223, %v1223
        %v1378 = vmul.f32 %v1057, %v1057
        %v1379 = vmul.f32 %v1226, %v1226
        %v1380 = vmul.f32 %v1059, %v1059
        %v1381 = vmul.f32 %v1228, %v1228
        %v1382 = vmul.f32 %v1062, %v1062
        %v1383 = vmul.f32 %v1231, %v1231
        %v1384 = vmul.f32 %v1064, %v1064
        %v1385 = vmul.f32 %v1233, %v1233
        %v1386 = vmul.f32 %v1067, %v1067
        %v1387 = vmul.f32 %v1236, %v1236
        %v1388 = vmul.f32 %v1069, %v1069
        %v1389 = vmul.f32 %v1238, %v1238
        %v1390 = vmul.f32 %v1072, %v1072
        %v1391 = vmul.f32 %v1241, %v1241
        %v1392 = vmul.f32 %v1074, %v1074
        %v1393 = vmul.f32 %v1243, %v1243
        %v1394 = vmul.f32 %v1077, %v1077
        %v1395 = vmul.f32 %v1246, %v1246
        %v1396 = vmul.f32 %v1079, %v1079
        %v1397 = vmul.f32 %v1248, %v1248
        %v1398 = vmul.f32 %v1082, %v1082
        %v1399 = vmul.f32 %v1251, %v1251
        %v1400 = vmul.f32 %v1084, %v1084
        %v1401 = vmul.f32 %v1253, %v1253
        %v1402 = vmul.f32 %v1087, %v1087
        %v1403 = vmul.f32 %v1256, %v1256
        %v1404 = vmul.f32 %v1089, %v1089
        %v1405 = vmul.f32 %v1258, %v1258
        %v1406 = vmul.f32 %v1092, %v1092
        %v1407 = vmul.f32 %v1261, %v1261
        %v1408 = vmul.f32 %v1094, %v1094
        %v1409 = vmul.f32 %v1263, %v1263
        %v1410 = vmul.f32 %v1097, %v1097
        %v1411 = vmul.f32 %v1266, %v1266
        %v1412 = vmul.f32 %v1099, %v1099
        %v1413 = vmul.f32 %v1268, %v1268
        %v1414 = vmul.f32 %v1102, %v1102
        %v1415 = vmul.f32 %v1271, %v1271
        %v1416 = vmul.f32 %v1104, %v1104
        %v1417 = vmul.f32 %v1273, %v1273
        %v1418 = vmul.f32 %v1107, %v1107
        %v1419 = vmul.f32 %v1276, %v1276
        %v1420 = vmul.f32 %v1109, %v1109
        %v1421 = vmul.f32 %v1278, %v1278
        %v1422 = vmul.f32 %v1112, %v1112
        %v1423 = vmul.f32 %v1281, %v1281
        %v1424 = vmul.f32 %v1114, %v1114
        %v1425 = vmul.f32 %v1283, %v1283
        %v1426 = vmul.f32 %v1117, %v1117
        %v1427 = vmul.f32 %v1286, %v1286
        %v1428 = vmul.f32 %v1119, %v1119
        %v1429 = vmul.f32 %v1288, %v1288
        %v1430 = vmul.f32 %v1122, %v1122
        %v1431 = vmul.f32 %v1291, %v1291
        %v1432 = vmul.f32 %v1124, %v1124
        %v1433 = vmul.f32 %v1293, %v1293
        %v1434 = vmul.f32 %v1127, %v1127
        %v1435 = vmul.f32 %v1296, %v1296
        %v1436 = vmul.f32 %v1129, %v1129
        %v1437 = vmul.f32 %v1298, %v1298
        %v1438 = vmul.f32 %v1132, %v1132
        %v1439 = vmul.f32 %v1301, %v1301
        %v1440 = vmul.f32 %v1134, %v1134
        %v1441 = vmul.f32 %v1303, %v1303
        %v1442 = vmul.f32 %v1137, %v1137
        %v1443 = vmul.f32 %v1306, %v1306
        %v1444 = vmul.f32 %v1139, %v1139
        %v1445 = vmul.f32 %v1308, %v1308
        %v1446 = vmul.f32 %v1142, %v1142
        %v1447 = vmul.f32 %v1311, %v1311
        %v1448 = vmul.f32 %v1144, %v1144
        %v1449 = vmul.f32 %v1313, %v1313
        %v1450 = vmul.f32 %v1147, %v1147
        %v1451 = vmul.f32 %v1316, %v1316
        %v1452 = vmul.f32 %v1149, %v1149
        %v1453 = vmul.f32 %v1318, %v1318
        %v1454 = vmul.f32 %v1152, %v1152
        %v1455 = vmul.f32 %v1321, %v1321
        %v1456 = vmul.f32 %v1154, %v1154
        %v1457 = vmul.f32 %v1323, %v1323
        %v1458 = vmul.f32 %v1157, %v1157
        %v1459 = vmul.f32 %v1326, %v1326
        %v1460 = vmul.f32 %v1159, %v1159
        %v1461 = vmul.f32 %v1328, %v1328
        %v1462 = vmul.f32 %v1162, %v1162
        %v1463 = vmul.f32 %v1331, %v1331
        %v1464 = vmul.f32 %v1164, %v1164
        %v1465 = vmul.f32 %v1333, %v1333
        %v1466 = vmul.f32 %v1167, %v1167
        %v1467 = vmul.f32 %v1336, %v1336
        %v1468 = vmul.f32 %v1169, %v1169
        %v1469 = vmul.f32 %v1338, %v1338
        %v1470 = vmul.f32 %v1172, %v1172
        %v1471 = vmul.f32 %v1341, %v1341
        %v1472 = vmul.f32 %v1174, %v1174
        %v1473 = vmul.f32 %v1343, %v1343
        %v1474 = vmul.f32 %v1177, %v1177
        %v1475 = vmul.f32 %v1346, %v1346
        %v1476 = vmul.f32 %v1179, %v1179
        %v1477 = vmul.f32 %v1348, %v1348
        %v1478 = vadd.f32 %v1350, %v1352
        %v1479 = vadd.f32 %v1478, %v1354
        %v1480 = vadd.f32 %v1479, %v1356
        %v1481 = vadd.f32 %v1480, %v1358
        %v1482 = vadd.f32 %v1481, %v1360
        %v1483 = vadd.f32 %v1482, %v1362
        %v1484 = vadd.f32 %v1483, %v1364
        %v1485 = vadd.f32 %v1484, %v1366
        %v1486 = vadd.f32 %v1485, %v1368
        %v1487 = vadd.f32 %v1486, %v1370
        %v1488 = vadd.f32 %v1487, %v1372
        %v1489 = vadd.f32 %v1488, %v1374
        %v1490 = vadd.f32 %v1489, %v1376
        %v1491 = vadd.f32 %v1490, %v1378
        %v1492 = vadd.f32 %v1491, %v1380
        %v1493 = vadd.f32 %v1492, %v1382
        %v1494 = vadd.f32 %v1493, %v1384
        %v1495 = vadd.f32 %v1494, %v1386
        %v1496 = vadd.f32 %v1495, %v1388
        %v1497 = vadd.f32 %v1496, %v1390
        %v1498 = vadd.f32 %v1497, %v1392
        %v1499 = vadd.f32 %v1498, %v1394
        %v1500 = vadd.f32 %v1499, %v1396
        %v1501 = vadd.f32 %v1500, %v1398
        %v1502 = vadd.f32 %v1501, %v1400
        %v1503 = vadd.f32 %v1502, %v1402
        %v1504 = vadd.f32 %v1503, %v1404
        %v1505 = vadd.f32 %v1504, %v1406
        %v1506 = vadd.f32 %v1505, %v1408
        %v1507 = vadd.f32 %v1506, %v1410
        %v1508 = vadd.f32 %v1507, %v1412
        %v1509 = vadd.f32 %v1508, %v1414
        %v1510 = vadd.f32 %v1509, %v1416
        %v1511 = vadd.f32 %v1510, %v1418
        %v1512 = vadd.f32 %v1511, %v1420
        %v1513 = vadd.f32 %v1512, %v1422
        %v1514 = vadd.f32 %v1513, %v1424
        %v1515 = vadd.f32 %v1514, %v1426
        %v1516 = vadd.f32 %v1515, %v1428
        %v1517 = vadd.f32 %v1516, %v1430
        %v1518 = vadd.f32 %v1517, %v1432
        %v1519 = vadd.f32 %v1518, %v1434
        %v1520 = vadd.f32 %v1519, %v1436
        %v1521 = vadd.f32 %v1520, %v1438
        %v1522 = vadd.f32 %v1521, %v1440
        %v1523 = vadd.f32 %v1522, %v1442
        %v1524 = vadd.f32 %v1523, %v1444
        %v1525 = vadd.f32 %v1524, %v1446
        %v1526 = vadd.f32 %v1525, %v1448
        %v1527 = vadd.f32 %v1526, %v1450
        %v1528 = vadd.f32 %v1527, %v1452
        %v1529 = vadd.f32 %v1528, %v1454
        %v1530 = vadd.f32 %v1529, %v1456
        %v1531 = vadd.f32 %v1530, %v1458
        %v1532 = vadd.f32 %v1531, %v1460
        %v1533 = vadd.f32 %v1532, %v1462
        %v1534 = vadd.f32 %v1533, %v1464
        %v1535 = vadd.f32 %v1534, %v1466
        %v1536 = vadd.f32 %v1535, %v1468
        %v1537 = vadd.f32 %v1536, %v1470
        %v1538 = vadd.f32 %v1537, %v1472
        %v1539 = vadd.f32 %v1538, %v1474
        %v1540 = vadd.f32 %v1539, %v1476
        %v1541 = vrot.slane %v1540, 4
        %v1542 = vadd.f32 %v1540, %v1541
        %v1543 = vrot.slane %v1542, 2
        %v1544 = vadd.f32 %v1542, %v1543
        %v1545 = vrot.slane %v1544, 1
        %v1546 = vadd.f32 %v1544, %v1545
        %v1547 = vadd.f32 %v1351, %v1353
        %v1548 = vadd.f32 %v1547, %v1355
        %v1549 = vadd.f32 %v1548, %v1357
        %v1550 = vadd.f32 %v1549, %v1359
        %v1551 = vadd.f32 %v1550, %v1361
        %v1552 = vadd.f32 %v1551, %v1363
        %v1553 = vadd.f32 %v1552, %v1365
        %v1554 = vadd.f32 %v1553, %v1367
        %v1555 = vadd.f32 %v1554, %v1369
        %v1556 = vadd.f32 %v1555, %v1371
        %v1557 = vadd.f32 %v1556, %v1373
        %v1558 = vadd.f32 %v1557, %v1375
        %v1559 = vadd.f32 %v1558, %v1377
        %v1560 = vadd.f32 %v1559, %v1379
        %v1561 = vadd.f32 %v1560, %v1381
        %v1562 = vadd.f32 %v1561, %v1383
        %v1563 = vadd.f32 %v1562, %v1385
        %v1564 = vadd.f32 %v1563, %v1387
        %v1565 = vadd.f32 %v1564, %v1389
        %v1566 = vadd.f32 %v1565, %v1391
        %v1567 = vadd.f32 %v1566, %v1393
        %v1568 = vadd.f32 %v1567, %v1395
        %v1569 = vadd.f32 %v1568, %v1397
        %v1570 = vadd.f32 %v1569, %v1399
        %v1571 = vadd.f32 %v1570, %v1401
        %v1572 = vadd.f32 %v1571, %v1403
        %v1573 = vadd.f32 %v1572, %v1405
        %v1574 = vadd.f32 %v1573, %v1407
        %v1575 = vadd.f32 %v1574, %v1409
        %v1576 = vadd.f32 %v1575, %v1411
        %v1577 = vadd.f32 %v1576, %v1413
        %v1578 = vadd.f32 %v1577, %v1415
        %v1579 = vadd.f32 %v1578, %v1417
        %v1580 = vadd.f32 %v1579, %v1419
        %v1581 = vadd.f32 %v1580, %v1421
        %v1582 = vadd.f32 %v1581, %v1423
        %v1583 = vadd.f32 %v1582, %v1425
        %v1584 = vadd.f32 %v1583, %v1427
        %v1585 = vadd.f32 %v1584, %v1429
        %v1586 = vadd.f32 %v1585, %v1431
        %v1587 = vadd.f32 %v1586, %v1433
        %v1588 = vadd.f32 %v1587, %v1435
        %v1589 = vadd.f32 %v1588, %v1437
        %v1590 = vadd.f32 %v1589, %v1439
        %v1591 = vadd.f32 %v1590, %v1441
        %v1592 = vadd.f32 %v1591, %v1443
        %v1593 = vadd.f32 %v1592, %v1445
        %v1594 = vadd.f32 %v1593, %v1447
        %v1595 = vadd.f32 %v1594, %v1449
        %v1596 = vadd.f32 %v1595, %v1451
        %v1597 = vadd.f32 %v1596, %v1453
        %v1598 = vadd.f32 %v1597, %v1455
        %v1599 = vadd.f32 %v1598, %v1457
        %v1600 = vadd.f32 %v1599, %v1459
        %v1601 = vadd.f32 %v1600, %v1461
        %v1602 = vadd.f32 %v1601, %v1463
        %v1603 = vadd.f32 %v1602, %v1465
        %v1604 = vadd.f32 %v1603, %v1467
        %v1605 = vadd.f32 %v1604, %v1469
        %v1606 = vadd.f32 %v1605, %v1471
        %v1607 = vadd.f32 %v1606, %v1473
        %v1608 = vadd.f32 %v1607, %v1475
        %v1609 = vadd.f32 %v1608, %v1477
        %v1610 = vrot.slane %v1609, 4
        %v1611 = vadd.f32 %v1609, %v1610
        %v1612 = vrot.slane %v1611, 2
        %v1613 = vadd.f32 %v1611, %v1612
        %v1614 = vrot.slane %v1613, 1
        %v1615 = vadd.f32 %v1613, %v1614
        %v1616 = vmax.f32 %v1546, 1e-24
        %v1617 = vmax.f32 %v1615, 1e-24
        %v1618 = vrsqrt.pop %v1616
        %v1619 = vmul.f32 %v1618, %v1616
        %v1620 = vmul.f32 %v1619, %v1618
        %v1621 = vmul.f32 0.5, %v1620
        %v1622 = vsub.f32 1.5, %v1621
        %v1623 = vmul.f32 %v1618, %v1622
        %vm1624 = vweird.f32 %v1616
        %vm1625 = vweird.f32 %v1618
        %vm1626 = vmor %vm1624, %vm1625
        %v1627 = vsel %vm1626, %v1618, %v1623
        %v1628 = vrsqrt.pop %v1617
        %v1629 = vmul.f32 %v1628, %v1617
        %v1630 = vmul.f32 %v1629, %v1628
        %v1631 = vmul.f32 0.5, %v1630
        %v1632 = vsub.f32 1.5, %v1631
        %v1633 = vmul.f32 %v1628, %v1632
        %vm1634 = vweird.f32 %v1617
        %vm1635 = vweird.f32 %v1628
        %vm1636 = vmor %vm1634, %vm1635
        %v1637 = vsel %vm1636, %v1628, %v1633
        %v1638 = vmax.f32 %v1022, 0.0
        %v1639 = vmax.f32 %v1191, 0.0
        %v1640 = vmax.f32 %v1024, 0.0
        %v1641 = vmax.f32 %v1193, 0.0
        %v1642 = vmax.f32 %v1027, 0.0
        %v1643 = vmax.f32 %v1196, 0.0
        %v1644 = vmax.f32 %v1029, 0.0
        %v1645 = vmax.f32 %v1198, 0.0
        %v1646 = vmax.f32 %v1032, 0.0
        %v1647 = vmax.f32 %v1201, 0.0
        %v1648 = vmax.f32 %v1034, 0.0
        %v1649 = vmax.f32 %v1203, 0.0
        %v1650 = vmax.f32 %v1037, 0.0
        %v1651 = vmax.f32 %v1206, 0.0
        %v1652 = vmax.f32 %v1039, 0.0
        %v1653 = vmax.f32 %v1208, 0.0
        %v1654 = vmax.f32 %v1042, 0.0
        %v1655 = vmax.f32 %v1211, 0.0
        %v1656 = vmax.f32 %v1044, 0.0
        %v1657 = vmax.f32 %v1213, 0.0
        %v1658 = vmax.f32 %v1047, 0.0
        %v1659 = vmax.f32 %v1216, 0.0
        %v1660 = vmax.f32 %v1049, 0.0
        %v1661 = vmax.f32 %v1218, 0.0
        %v1662 = vmax.f32 %v1052, 0.0
        %v1663 = vmax.f32 %v1221, 0.0
        %v1664 = vmax.f32 %v1054, 0.0
        %v1665 = vmax.f32 %v1223, 0.0
        %v1666 = vmax.f32 %v1057, 0.0
        %v1667 = vmax.f32 %v1226, 0.0
        %v1668 = vmax.f32 %v1059, 0.0
        %v1669 = vmax.f32 %v1228, 0.0
        %v1670 = vmax.f32 %v1062, 0.0
        %v1671 = vmax.f32 %v1231, 0.0
        %v1672 = vmax.f32 %v1064, 0.0
        %v1673 = vmax.f32 %v1233, 0.0
        %v1674 = vmax.f32 %v1067, 0.0
        %v1675 = vmax.f32 %v1236, 0.0
        %v1676 = vmax.f32 %v1069, 0.0
        %v1677 = vmax.f32 %v1238, 0.0
        %v1678 = vmax.f32 %v1072, 0.0
        %v1679 = vmax.f32 %v1241, 0.0
        %v1680 = vmax.f32 %v1074, 0.0
        %v1681 = vmax.f32 %v1243, 0.0
        %v1682 = vmax.f32 %v1077, 0.0
        %v1683 = vmax.f32 %v1246, 0.0
        %v1684 = vmax.f32 %v1079, 0.0
        %v1685 = vmax.f32 %v1248, 0.0
        %v1686 = vmax.f32 %v1082, 0.0
        %v1687 = vmax.f32 %v1251, 0.0
        %v1688 = vmax.f32 %v1084, 0.0
        %v1689 = vmax.f32 %v1253, 0.0
        %v1690 = vmax.f32 %v1087, 0.0
        %v1691 = vmax.f32 %v1256, 0.0
        %v1692 = vmax.f32 %v1089, 0.0
        %v1693 = vmax.f32 %v1258, 0.0
        %v1694 = vmax.f32 %v1092, 0.0
        %v1695 = vmax.f32 %v1261, 0.0
        %v1696 = vmax.f32 %v1094, 0.0
        %v1697 = vmax.f32 %v1263, 0.0
        %v1698 = vmax.f32 %v1097, 0.0
        %v1699 = vmax.f32 %v1266, 0.0
        %v1700 = vmax.f32 %v1099, 0.0
        %v1701 = vmax.f32 %v1268, 0.0
        %v1702 = vmax.f32 %v1102, 0.0
        %v1703 = vmax.f32 %v1271, 0.0
        %v1704 = vmax.f32 %v1104, 0.0
        %v1705 = vmax.f32 %v1273, 0.0
        %v1706 = vmax.f32 %v1107, 0.0
        %v1707 = vmax.f32 %v1276, 0.0
        %v1708 = vmax.f32 %v1109, 0.0
        %v1709 = vmax.f32 %v1278, 0.0
        %v1710 = vmax.f32 %v1112, 0.0
        %v1711 = vmax.f32 %v1281, 0.0
        %v1712 = vmax.f32 %v1114, 0.0
        %v1713 = vmax.f32 %v1283, 0.0
        %v1714 = vmax.f32 %v1117, 0.0
        %v1715 = vmax.f32 %v1286, 0.0
        %v1716 = vmax.f32 %v1119, 0.0
        %v1717 = vmax.f32 %v1288, 0.0
        %v1718 = vmax.f32 %v1122, 0.0
        %v1719 = vmax.f32 %v1291, 0.0
        %v1720 = vmax.f32 %v1124, 0.0
        %v1721 = vmax.f32 %v1293, 0.0
        %v1722 = vmax.f32 %v1127, 0.0
        %v1723 = vmax.f32 %v1296, 0.0
        %v1724 = vmax.f32 %v1129, 0.0
        %v1725 = vmax.f32 %v1298, 0.0
        %v1726 = vmax.f32 %v1132, 0.0
        %v1727 = vmax.f32 %v1301, 0.0
        %v1728 = vmax.f32 %v1134, 0.0
        %v1729 = vmax.f32 %v1303, 0.0
        %v1730 = vmax.f32 %v1137, 0.0
        %v1731 = vmax.f32 %v1306, 0.0
        %v1732 = vmax.f32 %v1139, 0.0
        %v1733 = vmax.f32 %v1308, 0.0
        %v1734 = vmax.f32 %v1142, 0.0
        %v1735 = vmax.f32 %v1311, 0.0
        %v1736 = vmax.f32 %v1144, 0.0
        %v1737 = vmax.f32 %v1313, 0.0
        %v1738 = vmax.f32 %v1147, 0.0
        %v1739 = vmax.f32 %v1316, 0.0
        %v1740 = vmax.f32 %v1149, 0.0
        %v1741 = vmax.f32 %v1318, 0.0
        %v1742 = vmax.f32 %v1152, 0.0
        %v1743 = vmax.f32 %v1321, 0.0
        %v1744 = vmax.f32 %v1154, 0.0
        %v1745 = vmax.f32 %v1323, 0.0
        %v1746 = vmax.f32 %v1157, 0.0
        %v1747 = vmax.f32 %v1326, 0.0
        %v1748 = vmax.f32 %v1159, 0.0
        %v1749 = vmax.f32 %v1328, 0.0
        %v1750 = vmax.f32 %v1162, 0.0
        %v1751 = vmax.f32 %v1331, 0.0
        %v1752 = vmax.f32 %v1164, 0.0
        %v1753 = vmax.f32 %v1333, 0.0
        %v1754 = vmax.f32 %v1167, 0.0
        %v1755 = vmax.f32 %v1336, 0.0
        %v1756 = vmax.f32 %v1169, 0.0
        %v1757 = vmax.f32 %v1338, 0.0
        %v1758 = vmax.f32 %v1172, 0.0
        %v1759 = vmax.f32 %v1341, 0.0
        %v1760 = vmax.f32 %v1174, 0.0
        %v1761 = vmax.f32 %v1343, 0.0
        %v1762 = vmax.f32 %v1177, 0.0
        %v1763 = vmax.f32 %v1346, 0.0
        %v1764 = vmax.f32 %v1179, 0.0
        %v1765 = vmax.f32 %v1348, 0.0
        %v1766 = vpack.c.bf16 %v1640, %v1638
        %v1767 = vpack.c.bf16 %v1641, %v1639
        %v1768 = vpack.c.bf16 %v1644, %v1642
        %v1769 = vpack.c.bf16 %v1645, %v1643
        %v1770 = vpack.c.bf16 %v1648, %v1646
        %v1771 = vpack.c.bf16 %v1649, %v1647
        %v1772 = vpack.c.bf16 %v1652, %v1650
        %v1773 = vpack.c.bf16 %v1653, %v1651
        %v1774 = vpack.c.bf16 %v1656, %v1654
        %v1775 = vpack.c.bf16 %v1657, %v1655
        %v1776 = vpack.c.bf16 %v1660, %v1658
        %v1777 = vpack.c.bf16 %v1661, %v1659
        %v1778 = vpack.c.bf16 %v1664, %v1662
        %v1779 = vpack.c.bf16 %v1665, %v1663
        %v1780 = vpack.c.bf16 %v1668, %v1666
        %v1781 = vpack.c.bf16 %v1669, %v1667
        %v1782 = vpack.c.bf16 %v1672, %v1670
        %v1783 = vpack.c.bf16 %v1673, %v1671
        %v1784 = vpack.c.bf16 %v1676, %v1674
        %v1785 = vpack.c.bf16 %v1677, %v1675
        %v1786 = vpack.c.bf16 %v1680, %v1678
        %v1787 = vpack.c.bf16 %v1681, %v1679
        %v1788 = vpack.c.bf16 %v1684, %v1682
        %v1789 = vpack.c.bf16 %v1685, %v1683
        %v1790 = vpack.c.bf16 %v1688, %v1686
        %v1791 = vpack.c.bf16 %v1689, %v1687
        %v1792 = vpack.c.bf16 %v1692, %v1690
        %v1793 = vpack.c.bf16 %v1693, %v1691
        %v1794 = vpack.c.bf16 %v1696, %v1694
        %v1795 = vpack.c.bf16 %v1697, %v1695
        %v1796 = vpack.c.bf16 %v1700, %v1698
        %v1797 = vpack.c.bf16 %v1701, %v1699
        %v1798 = vpack.c.bf16 %v1704, %v1702
        %v1799 = vpack.c.bf16 %v1705, %v1703
        %v1800 = vpack.c.bf16 %v1708, %v1706
        %v1801 = vpack.c.bf16 %v1709, %v1707
        %v1802 = vpack.c.bf16 %v1712, %v1710
        %v1803 = vpack.c.bf16 %v1713, %v1711
        %v1804 = vpack.c.bf16 %v1716, %v1714
        %v1805 = vpack.c.bf16 %v1717, %v1715
        %v1806 = vpack.c.bf16 %v1720, %v1718
        %v1807 = vpack.c.bf16 %v1721, %v1719
        %v1808 = vpack.c.bf16 %v1724, %v1722
        %v1809 = vpack.c.bf16 %v1725, %v1723
        %v1810 = vpack.c.bf16 %v1728, %v1726
        %v1811 = vpack.c.bf16 %v1729, %v1727
        %v1812 = vpack.c.bf16 %v1732, %v1730
        %v1813 = vpack.c.bf16 %v1733, %v1731
        %v1814 = vpack.c.bf16 %v1736, %v1734
        %v1815 = vpack.c.bf16 %v1737, %v1735
        %v1816 = vpack.c.bf16 %v1740, %v1738
        %v1817 = vpack.c.bf16 %v1741, %v1739
        %v1818 = vpack.c.bf16 %v1744, %v1742
        %v1819 = vpack.c.bf16 %v1745, %v1743
        %v1820 = vpack.c.bf16 %v1748, %v1746
        %v1821 = vpack.c.bf16 %v1749, %v1747
        %v1822 = vpack.c.bf16 %v1752, %v1750
        %v1823 = vpack.c.bf16 %v1753, %v1751
        %v1824 = vpack.c.bf16 %v1756, %v1754
        %v1825 = vpack.c.bf16 %v1757, %v1755
        %v1826 = vpack.c.bf16 %v1760, %v1758
        %v1827 = vpack.c.bf16 %v1761, %v1759
        %v1828 = vpack.c.bf16 %v1764, %v1762
        %v1829 = vpack.c.bf16 %v1765, %v1763
        %v1830 = vld [vmem:[%s3] sm:$0xf]
        %s1831 = sld [smem:[#allocation2]]
        %v1832 = vstv %s1831
        %1834 = vst [vmem:[#allocation1] ss:$9 sm:$0xff] %v1830
        %v1835 = vld [vmem:[#allocation1] sm:$0xff]
        %v1836 = vld [vmem:[#allocation1 + $0x9] sm:$0xff]
        %v1837 = vld [vmem:[#allocation1 + $0x12] sm:$0xff]
        %v1838 = vld [vmem:[#allocation1 + $0x1b] sm:$0xff]
        %1843 = vmatpush.bf16.msra.mxu0 %v1780
        %1844 = vmatpush.bf16.msra.mxu0 %v1778
        %1845 = vmatpush.bf16.msra.mxu0 %v1776
        %1846 = vmatpush.bf16.msra.mxu0 %v1774
        %1847 = vmatpush.bf16.msra.mxu0 %v1772
        %1848 = vmatpush.bf16.msra.mxu0 %v1770
        %1849 = vmatpush.bf16.msra.mxu0 %v1768
        %1850 = vmatpush.bf16.msra.mxu0 %v1766
        %1851 = vmatmul.bf16.gmra.mxu0 %v1835
        %v1852 = vpop.f32.mrf.mxu0
        %v1853 = vadd.f32 %v1832, %v1852
        %v1854 = vpop.f32.mrf.mxu0
        %1855 = vdwg.mxu0
        %1856 = vmatpush.bf16.msra.mxu0 %v1796
        %1857 = vmatpush.bf16.msra.mxu0 %v1794
        %1858 = vmatpush.bf16.msra.mxu0 %v1792
        %1859 = vmatpush.bf16.msra.mxu0 %v1790
        %1860 = vmatpush.bf16.msra.mxu0 %v1788
        %1861 = vmatpush.bf16.msra.mxu0 %v1786
        %1862 = vmatpush.bf16.msra.mxu0 %v1784
        %1863 = vmatpush.bf16.msra.mxu0 %v1782
        %1864 = vmatmul.bf16.gmra.mxu0 %v1836
        %v1865 = vpop.f32.mrf.mxu0
        %v1866 = vadd.f32 %v1853, %v1865
        %v1867 = vpop.f32.mrf.mxu0
        %1868 = vdwg.mxu0
        %1869 = vmatpush.bf16.msra.mxu0 %v1812
        %1870 = vmatpush.bf16.msra.mxu0 %v1810
        %1871 = vmatpush.bf16.msra.mxu0 %v1808
        %1872 = vmatpush.bf16.msra.mxu0 %v1806
        %1873 = vmatpush.bf16.msra.mxu0 %v1804
        %1874 = vmatpush.bf16.msra.mxu0 %v1802
        %1875 = vmatpush.bf16.msra.mxu0 %v1800
        %1876 = vmatpush.bf16.msra.mxu0 %v1798
        %1877 = vmatmul.bf16.gmra.mxu0 %v1837
        %v1878 = vpop.f32.mrf.mxu0
        %v1879 = vadd.f32 %v1866, %v1878
        %v1880 = vpop.f32.mrf.mxu0
        %1881 = vdwg.mxu0
        %1882 = vmatpush.bf16.msra.mxu0 %v1828
        %1883 = vmatpush.bf16.msra.mxu0 %v1826
        %1884 = vmatpush.bf16.msra.mxu0 %v1824
        %1885 = vmatpush.bf16.msra.mxu0 %v1822
        %1886 = vmatpush.bf16.msra.mxu0 %v1820
        %1887 = vmatpush.bf16.msra.mxu0 %v1818
        %1888 = vmatpush.bf16.msra.mxu0 %v1816
        %1889 = vmatpush.bf16.msra.mxu0 %v1814
        %1890 = vmatmul.bf16.gmra.mxu0 %v1838
        %v1891 = vpop.f32.mrf.mxu0
        %v1892 = vadd.f32 %v1879, %v1891
        %v1893 = vpop.f32.mrf.mxu0
        %1894 = vdwg.mxu0
        %1895 = vmatpush.bf16.msra.mxu0 %v1781
        %1896 = vmatpush.bf16.msra.mxu0 %v1779
        %1897 = vmatpush.bf16.msra.mxu0 %v1777
        %1898 = vmatpush.bf16.msra.mxu0 %v1775
        %1899 = vmatpush.bf16.msra.mxu0 %v1773
        %1900 = vmatpush.bf16.msra.mxu0 %v1771
        %1901 = vmatpush.bf16.msra.mxu0 %v1769
        %1902 = vmatpush.bf16.msra.mxu0 %v1767
        %1903 = vmatmul.bf16.gmra.mxu0 %v1835
        %v1904 = vpop.f32.mrf.mxu0
        %v1905 = vadd.f32 %v1832, %v1904
        %v1906 = vpop.f32.mrf.mxu0
        %1907 = vdwg.mxu0
        %1908 = vmatpush.bf16.msra.mxu0 %v1797
        %1909 = vmatpush.bf16.msra.mxu0 %v1795
        %1910 = vmatpush.bf16.msra.mxu0 %v1793
        %1911 = vmatpush.bf16.msra.mxu0 %v1791
        %1912 = vmatpush.bf16.msra.mxu0 %v1789
        %1913 = vmatpush.bf16.msra.mxu0 %v1787
        %1914 = vmatpush.bf16.msra.mxu0 %v1785
        %1915 = vmatpush.bf16.msra.mxu0 %v1783
        %1916 = vmatmul.bf16.gmra.mxu0 %v1836
        %v1917 = vpop.f32.mrf.mxu0
        %v1918 = vadd.f32 %v1905, %v1917
        %v1919 = vpop.f32.mrf.mxu0
        %1920 = vdwg.mxu0
        %1921 = vmatpush.bf16.msra.mxu0 %v1813
        %1922 = vmatpush.bf16.msra.mxu0 %v1811
        %1923 = vmatpush.bf16.msra.mxu0 %v1809
        %1924 = vmatpush.bf16.msra.mxu0 %v1807
        %1925 = vmatpush.bf16.msra.mxu0 %v1805
        %1926 = vmatpush.bf16.msra.mxu0 %v1803
        %1927 = vmatpush.bf16.msra.mxu0 %v1801
        %1928 = vmatpush.bf16.msra.mxu0 %v1799
        %1929 = vmatmul.bf16.gmra.mxu0 %v1837
        %v1930 = vpop.f32.mrf.mxu0
        %v1931 = vadd.f32 %v1918, %v1930
        %v1932 = vpop.f32.mrf.mxu0
        %1933 = vdwg.mxu0
        %1934 = vmatpush.bf16.msra.mxu0 %v1829
        %1935 = vmatpush.bf16.msra.mxu0 %v1827
        %1936 = vmatpush.bf16.msra.mxu0 %v1825
        %1937 = vmatpush.bf16.msra.mxu0 %v1823
        %1938 = vmatpush.bf16.msra.mxu0 %v1821
        %1939 = vmatpush.bf16.msra.mxu0 %v1819
        %1940 = vmatpush.bf16.msra.mxu0 %v1817
        %1941 = vmatpush.bf16.msra.mxu0 %v1815
        %1942 = vmatmul.bf16.gmra.mxu0 %v1838
        %v1943 = vpop.f32.mrf.mxu0
        %v1944 = vadd.f32 %v1931, %v1943
        %v1945 = vpop.f32.mrf.mxu0
        %1946 = vdwg.mxu0
        %vm1947 = vcmp.gt.f32.partialorder %v1892, 20.0
        %vm1948 = vcmp.gt.f32.partialorder %v1944, 20.0
        %v1949 = vmin.f32 %v1892, 20.0
        %v1950 = vmin.f32 %v1944, 20.0
        %v1951 = vmul.f32 %v1949, 1.442695
        %v1952 = vpow.pop %v1951
        %v1953 = vmul.f32 %v1950, 1.442695
        %v1954 = vpow.pop %v1953
        %v1955 = vadd.f32 %v1952, 1.0
        %v1956 = vlog2.pop %v1955
        %v1957 = vmul.f32 %v1956, 0.6931472
        %v1958 = vmul.f32 -0.5, %v1952
        %v1959 = vadd.f32 %v1958, 1.0
        %v1960 = vmul.f32 %v1959, %v1952
        %v1961 = vand.u32 2147483647, %v1952
        %vm1962 = vcmp.lt.f32.partialorder %v1961, 0.0004427343
        %v1963 = vsel %vm1962, %v1960, %v1957
        %v1964 = vadd.f32 %v1954, 1.0
        %v1965 = vlog2.pop %v1964
        %v1966 = vmul.f32 %v1965, 0.6931472
        %v1967 = vmul.f32 -0.5, %v1954
        %v1968 = vadd.f32 %v1967, 1.0
        %v1969 = vmul.f32 %v1968, %v1954
        %v1970 = vand.u32 2147483647, %v1954
        %vm1971 = vcmp.lt.f32.partialorder %v1970, 0.0004427343
        %v1972 = vsel %vm1971, %v1969, %v1966
        %v1973 = vsel %vm1947, %v1892, %v1963
        %v1974 = vsel %vm1948, %v1944, %v1972
        %v1975 = vmul.f32 %v1973, %v1627
        %v1976 = vmul.f32 %v1974, %v1637
        %v1977 = vperm.slane %v1975, 0
        %v1978 = vperm.slane %v1976, 0
        %v1979 = vmul.f32 %v1022, %v1977
        %v1980 = vmul.f32 %v1191, %v1978
        %v1981 = vmul.f32 %v1024, %v1977
        %v1982 = vmul.f32 %v1193, %v1978
        %v1983 = vmul.f32 %v1027, %v1977
        %v1984 = vmul.f32 %v1196, %v1978
        %v1985 = vmul.f32 %v1029, %v1977
        %v1986 = vmul.f32 %v1198, %v1978
        %v1987 = vmul.f32 %v1032, %v1977
        %v1988 = vmul.f32 %v1201, %v1978
        %v1989 = vmul.f32 %v1034, %v1977
        %v1990 = vmul.f32 %v1203, %v1978
        %v1991 = vmul.f32 %v1037, %v1977
        %v1992 = vmul.f32 %v1206, %v1978
        %v1993 = vmul.f32 %v1039, %v1977
        %v1994 = vmul.f32 %v1208, %v1978
        %v1995 = vmul.f32 %v1042, %v1977
        %v1996 = vmul.f32 %v1211, %v1978
        %v1997 = vmul.f32 %v1044, %v1977
        %v1998 = vmul.f32 %v1213, %v1978
        %v1999 = vmul.f32 %v1047, %v1977
        %v2000 = vmul.f32 %v1216, %v1978
        %v2001 = vmul.f32 %v1049, %v1977
        %v2002 = vmul.f32 %v1218, %v1978
        %v2003 = vmul.f32 %v1052, %v1977
        %v2004 = vmul.f32 %v1221, %v1978
        %v2005 = vmul.f32 %v1054, %v1977
        %v2006 = vmul.f32 %v1223, %v1978
        %v2007 = vmul.f32 %v1057, %v1977
        %v2008 = vmul.f32 %v1226, %v1978
        %v2009 = vmul.f32 %v1059, %v1977
        %v2010 = vmul.f32 %v1228, %v1978
        %v2011 = vmul.f32 %v1062, %v1977
        %v2012 = vmul.f32 %v1231, %v1978
        %v2013 = vmul.f32 %v1064, %v1977
        %v2014 = vmul.f32 %v1233, %v1978
        %v2015 = vmul.f32 %v1067, %v1977
        %v2016 = vmul.f32 %v1236, %v1978
        %v2017 = vmul.f32 %v1069, %v1977
        %v2018 = vmul.f32 %v1238, %v1978
        %v2019 = vmul.f32 %v1072, %v1977
        %v2020 = vmul.f32 %v1241, %v1978
        %v2021 = vmul.f32 %v1074, %v1977
        %v2022 = vmul.f32 %v1243, %v1978
        %v2023 = vmul.f32 %v1077, %v1977
        %v2024 = vmul.f32 %v1246, %v1978
        %v2025 = vmul.f32 %v1079, %v1977
        %v2026 = vmul.f32 %v1248, %v1978
        %v2027 = vmul.f32 %v1082, %v1977
        %v2028 = vmul.f32 %v1251, %v1978
        %v2029 = vmul.f32 %v1084, %v1977
        %v2030 = vmul.f32 %v1253, %v1978
        %v2031 = vmul.f32 %v1087, %v1977
        %v2032 = vmul.f32 %v1256, %v1978
        %v2033 = vmul.f32 %v1089, %v1977
        %v2034 = vmul.f32 %v1258, %v1978
        %v2035 = vmul.f32 %v1092, %v1977
        %v2036 = vmul.f32 %v1261, %v1978
        %v2037 = vmul.f32 %v1094, %v1977
        %v2038 = vmul.f32 %v1263, %v1978
        %v2039 = vmul.f32 %v1097, %v1977
        %v2040 = vmul.f32 %v1266, %v1978
        %v2041 = vmul.f32 %v1099, %v1977
        %v2042 = vmul.f32 %v1268, %v1978
        %v2043 = vmul.f32 %v1102, %v1977
        %v2044 = vmul.f32 %v1271, %v1978
        %v2045 = vmul.f32 %v1104, %v1977
        %v2046 = vmul.f32 %v1273, %v1978
        %v2047 = vmul.f32 %v1107, %v1977
        %v2048 = vmul.f32 %v1276, %v1978
        %v2049 = vmul.f32 %v1109, %v1977
        %v2050 = vmul.f32 %v1278, %v1978
        %v2051 = vmul.f32 %v1112, %v1977
        %v2052 = vmul.f32 %v1281, %v1978
        %v2053 = vmul.f32 %v1114, %v1977
        %v2054 = vmul.f32 %v1283, %v1978
        %v2055 = vmul.f32 %v1117, %v1977
        %v2056 = vmul.f32 %v1286, %v1978
        %v2057 = vmul.f32 %v1119, %v1977
        %v2058 = vmul.f32 %v1288, %v1978
        %v2059 = vmul.f32 %v1122, %v1977
        %v2060 = vmul.f32 %v1291, %v1978
        %v2061 = vmul.f32 %v1124, %v1977
        %v2062 = vmul.f32 %v1293, %v1978
        %v2063 = vmul.f32 %v1127, %v1977
        %v2064 = vmul.f32 %v1296, %v1978
        %v2065 = vmul.f32 %v1129, %v1977
        %v2066 = vmul.f32 %v1298, %v1978
        %v2067 = vmul.f32 %v1132, %v1977
        %v2068 = vmul.f32 %v1301, %v1978
        %v2069 = vmul.f32 %v1134, %v1977
        %v2070 = vmul.f32 %v1303, %v1978
        %v2071 = vmul.f32 %v1137, %v1977
        %v2072 = vmul.f32 %v1306, %v1978
        %v2073 = vmul.f32 %v1139, %v1977
        %v2074 = vmul.f32 %v1308, %v1978
        %v2075 = vmul.f32 %v1142, %v1977
        %v2076 = vmul.f32 %v1311, %v1978
        %v2077 = vmul.f32 %v1144, %v1977
        %v2078 = vmul.f32 %v1313, %v1978
        %v2079 = vmul.f32 %v1147, %v1977
        %v2080 = vmul.f32 %v1316, %v1978
        %v2081 = vmul.f32 %v1149, %v1977
        %v2082 = vmul.f32 %v1318, %v1978
        %v2083 = vmul.f32 %v1152, %v1977
        %v2084 = vmul.f32 %v1321, %v1978
        %v2085 = vmul.f32 %v1154, %v1977
        %v2086 = vmul.f32 %v1323, %v1978
        %v2087 = vmul.f32 %v1157, %v1977
        %v2088 = vmul.f32 %v1326, %v1978
        %v2089 = vmul.f32 %v1159, %v1977
        %v2090 = vmul.f32 %v1328, %v1978
        %v2091 = vmul.f32 %v1162, %v1977
        %v2092 = vmul.f32 %v1331, %v1978
        %v2093 = vmul.f32 %v1164, %v1977
        %v2094 = vmul.f32 %v1333, %v1978
        %v2095 = vmul.f32 %v1167, %v1977
        %v2096 = vmul.f32 %v1336, %v1978
        %v2097 = vmul.f32 %v1169, %v1977
        %v2098 = vmul.f32 %v1338, %v1978
        %v2099 = vmul.f32 %v1172, %v1977
        %v2100 = vmul.f32 %v1341, %v1978
        %v2101 = vmul.f32 %v1174, %v1977
        %v2102 = vmul.f32 %v1343, %v1978
        %v2103 = vmul.f32 %v1177, %v1977
        %v2104 = vmul.f32 %v1346, %v1978
        %v2105 = vmul.f32 %v1179, %v1977
        %v2106 = vmul.f32 %v1348, %v1978
        %2107 = vst [vmem:[%s276] sm:$0xff] %v1979
        %2108 = vst [vmem:[%s276 + $0x8] sm:$0xff] %v1980
        %2109 = vst [vmem:[%s276 + $0x10] sm:$0xff] %v1981
        %2110 = vst [vmem:[%s276 + $0x18] sm:$0xff] %v1982
        %2111 = vst [vmem:[%s276 + $0x20] sm:$0xff] %v1983
        %2112 = vst [vmem:[%s276 + $0x28] sm:$0xff] %v1984
        %2113 = vst [vmem:[%s276 + $0x30] sm:$0xff] %v1985
        %2114 = vst [vmem:[%s276 + $0x38] sm:$0xff] %v1986
        %2115 = vst [vmem:[%s276 + $0x40] sm:$0xff] %v1987
        %2116 = vst [vmem:[%s276 + $0x48] sm:$0xff] %v1988
        %2117 = vst [vmem:[%s276 + $0x50] sm:$0xff] %v1989
        %2118 = vst [vmem:[%s276 + $0x58] sm:$0xff] %v1990
        %2119 = vst [vmem:[%s276 + $0x60] sm:$0xff] %v1991
        %2120 = vst [vmem:[%s276 + $0x68] sm:$0xff] %v1992
        %2121 = vst [vmem:[%s276 + $0x70] sm:$0xff] %v1993
        %2122 = vst [vmem:[%s276 + $0x78] sm:$0xff] %v1994
        %2123 = vst [vmem:[%s276 + $0x80] sm:$0xff] %v1995
        %2124 = vst [vmem:[%s276 + $0x88] sm:$0xff] %v1996
        %2125 = vst [vmem:[%s276 + $0x90] sm:$0xff] %v1997
        %2126 = vst [vmem:[%s276 + $0x98] sm:$0xff] %v1998
        %2127 = vst [vmem:[%s276 + $0xa0] sm:$0xff] %v1999
        %2128 = vst [vmem:[%s276 + $0xa8] sm:$0xff] %v2000
        %2129 = vst [vmem:[%s276 + $0xb0] sm:$0xff] %v2001
        %2130 = vst [vmem:[%s276 + $0xb8] sm:$0xff] %v2002
        %2131 = vst [vmem:[%s276 + $0xc0] sm:$0xff] %v2003
        %2132 = vst [vmem:[%s276 + $0xc8] sm:$0xff] %v2004
        %2133 = vst [vmem:[%s276 + $0xd0] sm:$0xff] %v2005
        %2134 = vst [vmem:[%s276 + $0xd8] sm:$0xff] %v2006
        %2135 = vst [vmem:[%s276 + $0xe0] sm:$0xff] %v2007
        %2136 = vst [vmem:[%s276 + $0xe8] sm:$0xff] %v2008
        %2137 = vst [vmem:[%s276 + $0xf0] sm:$0xff] %v2009
        %2138 = vst [vmem:[%s276 + $0xf8] sm:$0xff] %v2010
        %2139 = vst [vmem:[%s276 + $0x100] sm:$0xff] %v2011
        %2140 = vst [vmem:[%s276 + $0x108] sm:$0xff] %v2012
        %2141 = vst [vmem:[%s276 + $0x110] sm:$0xff] %v2013
        %2142 = vst [vmem:[%s276 + $0x118] sm:$0xff] %v2014
        %2143 = vst [vmem:[%s276 + $0x120] sm:$0xff] %v2015
        %2144 = vst [vmem:[%s276 + $0x128] sm:$0xff] %v2016
        %2145 = vst [vmem:[%s276 + $0x130] sm:$0xff] %v2017
        %2146 = vst [vmem:[%s276 + $0x138] sm:$0xff] %v2018
        %2147 = vst [vmem:[%s276 + $0x140] sm:$0xff] %v2019
        %2148 = vst [vmem:[%s276 + $0x148] sm:$0xff] %v2020
        %2149 = vst [vmem:[%s276 + $0x150] sm:$0xff] %v2021
        %2150 = vst [vmem:[%s276 + $0x158] sm:$0xff] %v2022
        %2151 = vst [vmem:[%s276 + $0x160] sm:$0xff] %v2023
        %2152 = vst [vmem:[%s276 + $0x168] sm:$0xff] %v2024
        %2153 = vst [vmem:[%s276 + $0x170] sm:$0xff] %v2025
        %2154 = vst [vmem:[%s276 + $0x178] sm:$0xff] %v2026
        %2155 = vst [vmem:[%s276 + $0x180] sm:$0xff] %v2027
        %2156 = vst [vmem:[%s276 + $0x188] sm:$0xff] %v2028
        %2157 = vst [vmem:[%s276 + $0x190] sm:$0xff] %v2029
        %2158 = vst [vmem:[%s276 + $0x198] sm:$0xff] %v2030
        %2159 = vst [vmem:[%s276 + $0x1a0] sm:$0xff] %v2031
        %2160 = vst [vmem:[%s276 + $0x1a8] sm:$0xff] %v2032
        %2161 = vst [vmem:[%s276 + $0x1b0] sm:$0xff] %v2033
        %2162 = vst [vmem:[%s276 + $0x1b8] sm:$0xff] %v2034
        %2163 = vst [vmem:[%s276 + $0x1c0] sm:$0xff] %v2035
        %2164 = vst [vmem:[%s276 + $0x1c8] sm:$0xff] %v2036
        %2165 = vst [vmem:[%s276 + $0x1d0] sm:$0xff] %v2037
        %2166 = vst [vmem:[%s276 + $0x1d8] sm:$0xff] %v2038
        %2167 = vst [vmem:[%s276 + $0x1e0] sm:$0xff] %v2039
        %2168 = vst [vmem:[%s276 + $0x1e8] sm:$0xff] %v2040
        %2169 = vst [vmem:[%s276 + $0x1f0] sm:$0xff] %v2041
        %2170 = vst [vmem:[%s276 + $0x1f8] sm:$0xff] %v2042
        %2171 = vst [vmem:[%s276 + $0x200] sm:$0xff] %v2043
        %2172 = vst [vmem:[%s276 + $0x208] sm:$0xff] %v2044
        %2173 = vst [vmem:[%s276 + $0x210] sm:$0xff] %v2045
        %2174 = vst [vmem:[%s276 + $0x218] sm:$0xff] %v2046
        %2175 = vst [vmem:[%s276 + $0x220] sm:$0xff] %v2047
        %2176 = vst [vmem:[%s276 + $0x228] sm:$0xff] %v2048
        %2177 = vst [vmem:[%s276 + $0x230] sm:$0xff] %v2049
        %2178 = vst [vmem:[%s276 + $0x238] sm:$0xff] %v2050
        %2179 = vst [vmem:[%s276 + $0x240] sm:$0xff] %v2051
        %2180 = vst [vmem:[%s276 + $0x248] sm:$0xff] %v2052
        %2181 = vst [vmem:[%s276 + $0x250] sm:$0xff] %v2053
        %2182 = vst [vmem:[%s276 + $0x258] sm:$0xff] %v2054
        %2183 = vst [vmem:[%s276 + $0x260] sm:$0xff] %v2055
        %2184 = vst [vmem:[%s276 + $0x268] sm:$0xff] %v2056
        %2185 = vst [vmem:[%s276 + $0x270] sm:$0xff] %v2057
        %2186 = vst [vmem:[%s276 + $0x278] sm:$0xff] %v2058
        %2187 = vst [vmem:[%s276 + $0x280] sm:$0xff] %v2059
        %2188 = vst [vmem:[%s276 + $0x288] sm:$0xff] %v2060
        %2189 = vst [vmem:[%s276 + $0x290] sm:$0xff] %v2061
        %2190 = vst [vmem:[%s276 + $0x298] sm:$0xff] %v2062
        %2191 = vst [vmem:[%s276 + $0x2a0] sm:$0xff] %v2063
        %2192 = vst [vmem:[%s276 + $0x2a8] sm:$0xff] %v2064
        %2193 = vst [vmem:[%s276 + $0x2b0] sm:$0xff] %v2065
        %2194 = vst [vmem:[%s276 + $0x2b8] sm:$0xff] %v2066
        %2195 = vst [vmem:[%s276 + $0x2c0] sm:$0xff] %v2067
        %2196 = vst [vmem:[%s276 + $0x2c8] sm:$0xff] %v2068
        %2197 = vst [vmem:[%s276 + $0x2d0] sm:$0xff] %v2069
        %2198 = vst [vmem:[%s276 + $0x2d8] sm:$0xff] %v2070
        %2199 = vst [vmem:[%s276 + $0x2e0] sm:$0xff] %v2071
        %2200 = vst [vmem:[%s276 + $0x2e8] sm:$0xff] %v2072
        %2201 = vst [vmem:[%s276 + $0x2f0] sm:$0xff] %v2073
        %2202 = vst [vmem:[%s276 + $0x2f8] sm:$0xff] %v2074
        %2203 = vst [vmem:[%s276 + $0x300] sm:$0xff] %v2075
        %2204 = vst [vmem:[%s276 + $0x308] sm:$0xff] %v2076
        %2205 = vst [vmem:[%s276 + $0x310] sm:$0xff] %v2077
        %2206 = vst [vmem:[%s276 + $0x318] sm:$0xff] %v2078
        %2207 = vst [vmem:[%s276 + $0x320] sm:$0xff] %v2079
        %2208 = vst [vmem:[%s276 + $0x328] sm:$0xff] %v2080
        %2209 = vst [vmem:[%s276 + $0x330] sm:$0xff] %v2081
        %2210 = vst [vmem:[%s276 + $0x338] sm:$0xff] %v2082
        %2211 = vst [vmem:[%s276 + $0x340] sm:$0xff] %v2083
        %2212 = vst [vmem:[%s276 + $0x348] sm:$0xff] %v2084
        %2213 = vst [vmem:[%s276 + $0x350] sm:$0xff] %v2085
        %2214 = vst [vmem:[%s276 + $0x358] sm:$0xff] %v2086
        %2215 = vst [vmem:[%s276 + $0x360] sm:$0xff] %v2087
        %2216 = vst [vmem:[%s276 + $0x368] sm:$0xff] %v2088
        %2217 = vst [vmem:[%s276 + $0x370] sm:$0xff] %v2089
        %2218 = vst [vmem:[%s276 + $0x378] sm:$0xff] %v2090
        %2219 = vst [vmem:[%s276 + $0x380] sm:$0xff] %v2091
        %2220 = vst [vmem:[%s276 + $0x388] sm:$0xff] %v2092
        %2221 = vst [vmem:[%s276 + $0x390] sm:$0xff] %v2093
        %2222 = vst [vmem:[%s276 + $0x398] sm:$0xff] %v2094
        %2223 = vst [vmem:[%s276 + $0x3a0] sm:$0xff] %v2095
        %2224 = vst [vmem:[%s276 + $0x3a8] sm:$0xff] %v2096
        %2225 = vst [vmem:[%s276 + $0x3b0] sm:$0xff] %v2097
        %2226 = vst [vmem:[%s276 + $0x3b8] sm:$0xff] %v2098
        %2227 = vst [vmem:[%s276 + $0x3c0] sm:$0xff] %v2099
        %2228 = vst [vmem:[%s276 + $0x3c8] sm:$0xff] %v2100
        %2229 = vst [vmem:[%s276 + $0x3d0] sm:$0xff] %v2101
        %2230 = vst [vmem:[%s276 + $0x3d8] sm:$0xff] %v2102
        %2231 = vst [vmem:[%s276 + $0x3e0] sm:$0xff] %v2103
        %2232 = vst [vmem:[%s276 + $0x3e8] sm:$0xff] %v2104
        %2233 = vst [vmem:[%s276 + $0x3f0] sm:$0xff] %v2105
        %2234 = vst [vmem:[%s276 + $0x3f8] sm:$0xff] %v2106
        %v2237 = vrot.slane %v1974, 7
        %vm2238 = vcmask 1040384
        %v2239 = vsel %vm2238, %v1973, %v2237
        %v2241 = vlaneseq
        %vm2242 = vcmp.ge.s32.totalorder %v2241, 0
        %vm2243 = vcmp.lt.s32.totalorder %v2241, 256
        %vm2244 = vmand %vm2242, %vm2243
        %2245 = vst.msk [vmem:[%s283] sm:$0x3] %vm2244, %v2239
        %s2246 = sand.u32 %s159, 1
        %s2247 = scalar_lea.sflag [#allocation4], %s2246
        %s2248 = sand.u32 %s159, 1
        %s2249 = smul.addr %s2248, 1024
        %s2250 = scalar_lea.vmem [#allocation3], %s2249
        %s2251 = sand.u32 %s187, 1
        %s2252 = scalar_lea.sflag [#allocation6], %s2251
        %s2253 = sand.u32 %s187, 1
        %s2254 = smul.addr %s2253, 2
        %s2255 = scalar_lea.vmem [#allocation5], %s2254
        // Predicated region
        $region41: #{tpu_custom_call.1} parent=39 // pred_check
          %p2256 = pneg %p169
        $region42: #{tpu_custom_call.1} parent=39 // pred_check_branch
          %2258 = sbr.rel (%p2256) target = $region44
        $region43: #{tpu_custom_call.1} parent=39 // pred_region
          %s2259 = smul.u32 2, %s30
          %2261 = vsyncadd %s2247, 0
          %s2262 = smul.addr %s29, 128
          %s2263 = sadd.s32 %s2259, %s2262
          %s2264 = smul.addr %s2263, 8
          %s2265 = scalar_lea.hbm %s5, %s2264
          %s2266 = sshll.u32 %s2250, 4
          %s2267 = int_to_ptr.vmem [resolvable:$true] %s2266
          %s2268 = sshll.u32 %s2265, 4
          %s2269 = int_to_ptr.hbm [resolvable:$true] %s2268
          %2274 = dma.vmem_to_hbm [thread:$0]  %s2267, 16384, %s2269, %s2247, 256, 256, 16
        $region44: #{tpu_custom_call.1} parent=39 // pred_fallthru
          _
        // Predicated region
        $region45: #{tpu_custom_call.1} parent=39 // pred_check
          %p2275 = pneg %p197
        $region46: #{tpu_custom_call.1} parent=39 // pred_check_branch
          %2277 = sbr.rel (%p2275) target = $region48
        $region47: #{tpu_custom_call.1} parent=39 // pred_region
          %s2278 = smul.u32 2, %s30
          %2280 = vsyncadd %s2252, 0
          %s2281 = smul.addr %s29, 2
          %s2282 = sadd.s32 %s2278, %s2281
          %s2283 = scalar_lea.hbm %s6, %s2282
          %s2285 = sshll.u32 %s2255, 4
          %s2286 = int_to_ptr.vmem [resolvable:$true] %s2285
          %s2287 = sshll.u32 %s2283, 4
          %s2288 = int_to_ptr.hbm [resolvable:$true] %s2287
          %2290 = dma.vmem_to_hbm [thread:$0]  %s2286, 32, %s2288, %s2252
        $region48: #{tpu_custom_call.1} parent=39 // pred_fallthru
          _
      $region40: #{tpu_custom_call.1} parent=5 // pred_fallthru
        _
      %p2291 = scmp.le.s32.totalorder 2, %s20
      // Predicated region
      $region49: #{tpu_custom_call.1} parent=5 // pred_check
        %p2292 = pneg %p2291
      $region50: #{tpu_custom_call.1} parent=5 // pred_check_branch
        %2294 = sbr.rel (%p2292) target = $region52
      $region51: #{tpu_custom_call.1} parent=5 // pred_region
        %s2295 = ssub.s32 %s20, 2
        // Predicated region
        $region53: #{tpu_custom_call.1} parent=51 // pred_check
          %p2296 = pneg %p175
        $region54: #{tpu_custom_call.1} parent=51 // pred_check_branch
          %2298 = sbr.rel (%p2296) target = $region56
        $region55: #{tpu_custom_call.1} parent=51 // pred_region
          %s2299 = sand.u32 %s160, 1
          %s2300 = scalar_lea.sflag [#allocation4], %s2299
          %s2301 = sand.u32 %s160, 1
          %s2302 = smul.addr %s2301, 1024
          %s2303 = scalar_lea.vmem [#allocation3], %s2302
          %2305 = dma.done %s2300, 16384
        $region56: #{tpu_custom_call.1} parent=51 // pred_fallthru
          _
        // Predicated region
        $region57: #{tpu_custom_call.1} parent=51 // pred_check
          %p2306 = pneg %p203
        $region58: #{tpu_custom_call.1} parent=51 // pred_check_branch
          %2308 = sbr.rel (%p2306) target = $region60
        $region59: #{tpu_custom_call.1} parent=51 // pred_region
          %s2309 = sand.u32 %s188, 1
          %s2310 = scalar_lea.sflag [#allocation6], %s2309
          %s2311 = sand.u32 %s188, 1
          %s2312 = smul.addr %s2311, 2
          %s2313 = scalar_lea.vmem [#allocation5], %s2312
          %2315 = dma.done %s2310, 32
        $region60: #{tpu_custom_call.1} parent=51 // pred_fallthru
          _
      $region52: #{tpu_custom_call.1} parent=5 // pred_fallthru
        _
    $region6: #{tpu_custom_call.1} parent=1 // loop_footer
      %s24 = sadd.s32 1, %s20
    $region7: #{tpu_custom_call.1} parent=1 // loop_footer_branch
      %19 = sbr.rel target = $region3
    $region8: #{tpu_custom_call.1} parent=1 // loop_exit
      _
    %2316 = vsyncpa [#allocation4], 1
    %s2317 = scalar_lea.sflag [#allocation4], 1
    %2318 = vsyncpa %s2317, 1
    %2319 = vsyncpa [#allocation6], 1
    %s2320 = scalar_lea.sflag [#allocation6], 1
    %2321 = vsyncpa %s2320, 1

</llo_original>
